<compile_context>
chip_gen: v5e
topology: v5e:2x2
jax: 0.10.0
libtpu: 0.0.40
codegen_flags: <defaults>
</compile_context>

<pallas_src>
import jax
import jax.numpy as jnp
from jax import lax
from jax.experimental import pallas as pl
from jax.experimental.pallas import tpu as pltpu

_VMEM = pl.BlockSpec(memory_space=pltpu.MemorySpace.VMEM)

# Flip to jnp.bfloat16 to halve fc-weight HBM/VMEM traffic (the MXU still
# accumulates in f32 via preferred_element_type). Kept f32 so logits match the
# f32 PyTorch reference bit-for-bit.
# TODO(synk): per-generation fc-weight quantization (fp8 on v7x, int8+scales on
# v5e/v6e) would further shrink the dominant HBM stream of the head.
FC_WEIGHT_DTYPE = jnp.float32


def _round_up(x, m):
    return ((x + m - 1) // m) * m


def _unroll(n):
    # Full unroll for short recurrences gives the LLO scheduler cross-step
    # visibility (adjacent steps' MXU pushes / EUP sigmoid-tanh co-issue);
    # capped for long sequences.
    return True if n <= 16 else 8


def _lstm_cell(gates, c_prev, H):
    # PyTorch gate order i, f, g, o.  gates: (B, 4H)
    i = jax.nn.sigmoid(gates[:, 0 * H:1 * H])
    f = jax.nn.sigmoid(gates[:, 1 * H:2 * H])
    g = jnp.tanh(gates[:, 2 * H:3 * H])
    o = jax.nn.sigmoid(gates[:, 3 * H:4 * H])
    c = f * c_prev + i * g
    h = o * jnp.tanh(c)
    return h, c


# ----------------------------------------------------------------------------
# Kernel 1: fused bidirectional melody LSTM (both directions interleaved in a
# single recurrence) + the vocab-tile-invariant context head in its epilogue.
# Output: c2 (Bp, H) — the input of the final fc layer.
# ----------------------------------------------------------------------------
def _melody_context_kernel(x_ref, wih8_ref, whh_ref, b8_ref,
                           mcp_wa_ref, mcp_wb_ref, mcp_b_ref,
                           wv_ref, bv_ref,
                           cc_wa_ref, cc_wb1_ref, cc_wb2_ref, cc_b_ref,
                           c2_ref, gx_ref):
    # x_ref   : (T*Bp, M)  time-major flat melody features, row r = t*Bp + b
    # wih8_ref: (M, 8H)    [fwd | bwd] pre-transposed input->gate weights
    # whh_ref : (2, H, 4H) per-direction hidden->gate weights
    # b8_ref  : (1, 8H)    [fwd | bwd] b_ih + b_hh
    # c2_ref  : (Bp, H)    output: combined_context_projection(...)
    # gx_ref  : (T*Bp, 8H) scratch: hoisted input projection for BOTH directions
    Bp, H = c2_ref.shape
    H4 = 4 * H
    T = x_ref.shape[0] // Bp
    f32 = jnp.float32

    # One fused (T*Bp, M) @ (M, 8H) input projection for both directions,
    # hoisted off the serial recurrence path (one well-shaped MXU matmul
    # instead of 2*T tiny ones).
    gx_ref[...] = (jnp.dot(x_ref[...], wih8_ref[...],
                           preferred_element_type=f32) + b8_ref[...])

    def step(t, carry):
        h_f, c_f, h_b, c_b = carry
        # Bp is padded to a multiple of 8 in the wrapper, so both row offsets
        # are sublane-aligned: every per-step slice is an aligned full-tile
        # view (no per-step relayout copies on the latency-critical chain).
        row_f = pl.multiple_of(t * Bp, 8)
        row_b = pl.multiple_of((T - 1 - t) * Bp, 8)   # bwd dir reads reversed time
        gates_f = gx_ref[pl.ds(row_f, Bp), pl.ds(0, H4)] + jnp.dot(
            h_f, whh_ref[0], preferred_element_type=f32)
        gates_b = gx_ref[pl.ds(row_b, Bp), pl.ds(H4, H4)] + jnp.dot(
            h_b, whh_ref[1], preferred_element_type=f32)
        # Both directions interleaved in ONE loop: the two independent chains'
        # MXU pushes and EUP transcendentals fill each other's latency bubbles
        # (single-TC v5e/v6e would otherwise run them back-to-back).
        h_f, c_f = _lstm_cell(gates_f, c_f, H)
        h_b, c_b = _lstm_cell(gates_b, c_b, H)
        return (h_f, c_f, h_b, c_b)

    z = jnp.zeros((Bp, H), f32)
    h_f, _, h_b, _ = lax.fori_loop(0, T, step, (z, z, z, z), unroll=_unroll(T))

    # --- context-head epilogue (vocab-tile-invariant work hoisted out of the
    #     fc grid). melody_context = [h_f | h_b]; every concat is folded into
    #     split matmuls so no lane concat is emitted. ---
    # melody_context_projection:
    pmc = (jnp.dot(h_f, mcp_wa_ref[...], preferred_element_type=f32)
           + jnp.dot(h_b, mcp_wb_ref[...], preferred_element_type=f32)
           + mcp_b_ref[...])
    # Attention with one key/value: softmax over the length-1 key axis is
    # identically 1, so context == value_projection(pmc); the query/key
    # projections and the softmax are mathematically dead (bit-identical to
    # the PyTorch reference).
    ctx = jnp.dot(pmc, wv_ref[...], preferred_element_type=f32) + bv_ref[...]
    # combined_context_projection over concat([context, melody_context], -1):
    c2 = (jnp.dot(ctx, cc_wa_ref[...], preferred_element_type=f32)
          + jnp.dot(h_f, cc_wb1_ref[...], preferred_element_type=f32)
          + jnp.dot(h_b, cc_wb2_ref[...], preferred_element_type=f32)
          + cc_b_ref[...])
    c2_ref[...] = c2.astype(c2_ref.dtype)


def melody_context_c2(melody_input, params):
    """melody_input: (B, Tm, M). Returns c2 of shape (Bp, H), Bp = B padded to 8."""
    B, T, M = melody_input.shape
    H = params['wv_t'].shape[0]
    Bp = max(8, _round_up(B, 8))
    x = melody_input.astype(jnp.float32)
    if Bp != B:
        # Pad the batch to the 8-row sublane tile; padded rows see zero input
        # (finite LSTM math) and are sliced away in the wrapper.
        x = jnp.pad(x, ((0, Bp - B), (0, 0), (0, 0)))
    x_flat = jnp.transpose(x, (1, 0, 2)).reshape(T * Bp, M)   # time-major flat
    # TODO(synk): for very long melodies, block x/gx over T (emit_pipeline);
    # whole-array VMEM residency is only intended for typical melody lengths.
    return pl.pallas_call(
        _melody_context_kernel,
        out_shape=jax.ShapeDtypeStruct((Bp, H), jnp.float32),
        in_specs=[_VMEM] * 13,
        out_specs=_VMEM,
        scratch_shapes=[pltpu.VMEM((T * Bp, 8 * H), jnp.float32)],
    )(x_flat, params['mel_wih8'], params['mel_whh'], params['mel_b8'],
      params['mcp_wa'], params['mcp_wb'], params['mcp_b'],
      params['wv_t'], params['bv'],
      params['cc_wa'], params['cc_wb1'], params['cc_wb2'], params['cc_b'])


# ----------------------------------------------------------------------------
# Kernel 2: vocab-tiled fc head. Emits (Bp, Vp) logits only (no S-fold output
# amplification); lane-dense 128-multiple tiles; weight stream is the only
# per-tile DMA. fc_dropout is identity in eval mode.
# ----------------------------------------------------------------------------
def _fc_kernel(c2_ref, wf_ref, bf_ref, out_ref):
    out_ref[...] = (jnp.dot(c2_ref[...].astype(wf_ref.dtype), wf_ref[...],
                            preferred_element_type=jnp.float32)
                    + bf_ref[...]).astype(out_ref.dtype)


def _pick_vocab_tile(V, H, weight_itemsize):
    # Largest lane-aligned tile whose DOUBLE-BUFFERED weight block stays inside
    # a conservative VMEM budget — safe under v5e's 16 MiB default scoped limit
    # and v7x's 64 MiB physical VMEM without raising vmem_limit_bytes.
    budget = 10 * 1024 * 1024
    tv = 128
    for cand in (2048, 1024, 512, 256, 128):
        if 2 * H * cand * weight_itemsize <= budget:
            tv = cand
            break
    return min(tv, _round_up(V, 128))


def fc_logits(c2, params):
    Bp, H = c2.shape
    wf, bf = params['fc_wt'], params['fc_b']
    Vp = wf.shape[1]                    # padded to a multiple of the tile at init
    tv = _pick_vocab_tile(Vp, H, wf.dtype.itemsize)
    return pl.pallas_call(
        _fc_kernel,
        out_shape=jax.ShapeDtypeStruct((Bp, Vp), jnp.float32),
        grid=(Vp // tv,),
        in_specs=[
            pl.BlockSpec((Bp, H), lambda v: (0, 0)),   # c2 (tile-invariant)
            pl.BlockSpec((H, tv), lambda v: (0, v)),   # fc weight tile
            pl.BlockSpec((1, tv), lambda v: (0, v)),   # fc bias tile
        ],
        out_specs=pl.BlockSpec((Bp, tv), lambda v: (0, v)),
        # "parallel" lets the vocab tiles shard across TensorCores on v7x.
        # TODO(synk): if profiling shows no cross-core sharding on v7x, switch
        # to pltpu.CORE_PARALLEL / pl.core_map for an explicit per-core split.
        compiler_params=pltpu.CompilerParams(
            dimension_semantics=("parallel",)),
    )(c2, wf, bf)


# ----------------------------------------------------------------------------
# Parameter init: PyTorch-layout weights generated, then pre-transposed /
# concatenated / bias-summed / padded ONCE so the forward emits no transposes.
# ----------------------------------------------------------------------------
def init_params(key, vocab_size, emb_dim, melody_dim, hidden_dim):
    ks = iter(jax.random.split(key, 48))
    n = lambda shape: (0.1 * jax.random.normal(next(ks), shape)).astype(jnp.float32)
    H, V = hidden_dim, vocab_size

    def lstm_dir(in_dim):
        w_ih, w_hh = n((4 * H, in_dim)), n((4 * H, H))
        b_ih, b_hh = n((4 * H,)), n((4 * H,))
        return (jnp.transpose(w_ih), jnp.transpose(w_hh),
                (b_ih + b_hh).reshape(1, 4 * H))

    mf, mb = lstm_dir(melody_dim), lstm_dir(melody_dim)
    # lyrics LSTM params exist in the module but the branch is mathematically
    # dead in this forward (single-key attention) — kept for parity, unused.
    ly = lstm_dir(emb_dim)

    mcp_wt = jnp.transpose(n((H, 2 * H)))          # (2H, H)
    cc_wt = jnp.transpose(n((H, 3 * H)))           # (3H, H)

    fc_wt = jnp.transpose(n((V, H))).astype(FC_WEIGHT_DTYPE)   # (H, V)
    fc_b = n((V,)).reshape(1, V)
    tv = _pick_vocab_tile(V, H, fc_wt.dtype.itemsize)
    Vp = _round_up(V, tv)                          # pad vocab to a whole tile
    if Vp != V:
        fc_wt = jnp.pad(fc_wt, ((0, 0), (0, Vp - V)))
        fc_b = jnp.pad(fc_b, ((0, 0), (0, Vp - V)))

    return {
        'embedding': n((V, emb_dim)),              # (unpadded V also read from here)
        # melody bi-LSTM: [fwd | bwd] fused input weights / biases
        'mel_wih8': jnp.concatenate([mf[0], mb[0]], axis=1),   # (M, 8H)
        'mel_whh': jnp.stack([mf[1], mb[1]]),                  # (2, H, 4H)
        'mel_b8': jnp.concatenate([mf[2], mb[2]], axis=1),     # (1, 8H)
        # lyrics LSTM (module parity only; dead in forward)
        'lyr_wih_t': ly[0], 'lyr_whh_t': ly[1], 'lyr_b': ly[2],
        # attention q/k exist in the module but are mathematically dead here
        'wq': n((H, H)), 'bq': n((H,)),
        'wk': n((H, H)), 'bk': n((H,)),
        'wv_t': jnp.transpose(n((H, H))), 'bv': n((H,)).reshape(1, H),
        # melody_context_projection, split for the folded [h_f | h_b] concat
        'mcp_wa': mcp_wt[:H], 'mcp_wb': mcp_wt[H:], 'mcp_b': n((H,)).reshape(1, H),
        # combined_context_projection, split for the folded [ctx | h_f | h_b]
        'cc_wa': cc_wt[:H], 'cc_wb1': cc_wt[H:2 * H], 'cc_wb2': cc_wt[2 * H:],
        'cc_b': n((H,)).reshape(1, H),
        # fc (H -> vocab), padded to a multiple of the vocab tile
        'fc_wt': fc_wt, 'fc_b': fc_b,
    }


# ----------------------------------------------------------------------------
# Forward (use_attention=True path, which forces bidirectional melody LSTM)
# ----------------------------------------------------------------------------
def lyrics_generator_forward(params, word_input, melody_input):
    B, S = word_input.shape
    V = params['embedding'].shape[0]
    # The word-embedding gather and the lyrics LSTM cannot influence the logits
    # (softmax over a single attention key == 1), so the whole lyrics branch is
    # deleted — it was the dominant latency-bound work in the old forward.
    c2 = melody_context_c2(melody_input, params)        # (Bp, H)
    logits = fc_logits(c2, params)[:B, :V]              # (B, V)
    # TODO(synk): fc_dropout modeled as identity (eval-mode semantics).
    # Single-key attention makes the logits identical at every position, so the
    # (B, S, V) expansion happens OUTSIDE the kernels (no S x in-kernel writes).
    return jnp.broadcast_to(logits[:, None, :], (B, S, V))


if __name__ == "__main__":
    B, S, Tm = 2, 8, 8
    EMB, MEL, HID, VOCAB = 32, 16, 32, 128

    key = jax.random.PRNGKey(0)
    k_params, k_words, k_mel = jax.random.split(key, 3)

    params = init_params(k_params, VOCAB, EMB, MEL, HID)
    word_input = jax.random.randint(k_words, (B, S), 0, VOCAB, dtype=jnp.int32)
    melody_input = jax.random.normal(k_mel, (B, Tm, MEL), dtype=jnp.float32)

    logits = lyrics_generator_forward(params, word_input, melody_input)
    logits = jax.block_until_ready(logits)
    assert logits.shape == (B, S, VOCAB) and logits.dtype == jnp.float32
    assert bool(jnp.all(jnp.isfinite(logits)))
    print("KERNEL_OK")
</pallas_src>

<mosaic_0001>
module attributes {stable_mosaic.version = 11 : i64} {
  func.func @_melody_context_kernel(%arg0: memref<64x16xf32, #tpu.memory_space<vmem>>, %arg1: memref<16x256xf32, #tpu.memory_space<vmem>>, %arg2: memref<2x32x128xf32, #tpu.memory_space<vmem>>, %arg3: memref<1x256xf32, #tpu.memory_space<vmem>>, %arg4: memref<32x32xf32, #tpu.memory_space<vmem>>, %arg5: memref<32x32xf32, #tpu.memory_space<vmem>>, %arg6: memref<1x32xf32, #tpu.memory_space<vmem>>, %arg7: memref<32x32xf32, #tpu.memory_space<vmem>>, %arg8: memref<1x32xf32, #tpu.memory_space<vmem>>, %arg9: memref<32x32xf32, #tpu.memory_space<vmem>>, %arg10: memref<32x32xf32, #tpu.memory_space<vmem>>, %arg11: memref<32x32xf32, #tpu.memory_space<vmem>>, %arg12: memref<1x32xf32, #tpu.memory_space<vmem>>, %arg13: memref<8x32xf32, #tpu.memory_space<vmem>>, %arg14: memref<64x256xf32, #tpu.memory_space<vmem>>) attributes {dimension_semantics = [], scalar_prefetch = 0 : i64, scratch_operands = 1 : i64, tpu.core_type = #tpu.core_type<tc>} {
    %c0 = arith.constant 0 : index
    %c0_0 = arith.constant 0 : index
    %0 = vector.load %arg0[%c0, %c0_0] : memref<64x16xf32, #tpu.memory_space<vmem>>, vector<64x16xf32>
    %c0_1 = arith.constant 0 : index
    %c0_2 = arith.constant 0 : index
    %1 = vector.load %arg1[%c0_1, %c0_2] : memref<16x256xf32, #tpu.memory_space<vmem>>, vector<16x256xf32>
    %cst = arith.constant dense<0.000000e+00> : vector<64x256xf32>
    %2 = tpu.matmul %0, %1, %cst {dimension_numbers = #tpu.dot_dimension_numbers<[1], [0], [0], [1], [0, 0, 1, 1], [], []>} : vector<64x16xf32>, vector<16x256xf32>, vector<64x256xf32> -> vector<64x256xf32>
    %c0_3 = arith.constant 0 : index
    %c0_4 = arith.constant 0 : index
    %3 = vector.load %arg3[%c0_3, %c0_4] : memref<1x256xf32, #tpu.memory_space<vmem>>, vector<1x256xf32>
    %4 = vector.broadcast %3 : vector<1x256xf32> to vector<64x256xf32>
    %5 = arith.addf %2, %4 : vector<64x256xf32>
    %c0_5 = arith.constant 0 : index
    %c0_6 = arith.constant 0 : index
    %6 = vector.load %arg14[%c0_5, %c0_6] : memref<64x256xf32, #tpu.memory_space<vmem>>, vector<64x256xf32>
    tpu.vector_store %arg14[%c0_5, %c0_6], %5 {strides = array<i32>} : memref<64x256xf32, #tpu.memory_space<vmem>>, vector<64x256xf32>,
    %cst_7 = arith.constant 0.000000e+00 : f32
    %7 = vector.broadcast %cst_7 : f32 to vector<8x32xf32>
    %c0_i32 = arith.constant 0 : i32
    %c8_i32 = arith.constant 8 : i32
    %8 = arith.muli %c0_i32, %c8_i32 : i32
    %9 = tpu.assume_multiple %8, 8 : i32
    %c7_i32 = arith.constant 7 : i32
    %10 = arith.subi %c7_i32, %c0_i32 : i32
    %c8_i32_8 = arith.constant 8 : i32
    %11 = arith.muli %10, %c8_i32_8 : i32
    %12 = tpu.assume_multiple %11, 8 : i32
    %13 = arith.index_cast %9 : i32 to index
    %c0_9 = arith.constant 0 : index
    %14 = vector.load %arg14[%13, %c0_9] : memref<64x256xf32, #tpu.memory_space<vmem>>, vector<8x128xf32>
    %c0_10 = arith.constant 0 : index
    %c0_11 = arith.constant 0 : index
    %c0_12 = arith.constant 0 : index
    %15 = vector.load %arg2[%c0_10, %c0_11, %c0_12] : memref<2x32x128xf32, #tpu.memory_space<vmem>>, vector<1x32x128xf32>
    %16 = vector.shape_cast %15 : vector<1x32x128xf32> to vector<32x128xf32>
    %cst_13 = arith.constant dense<0.000000e+00> : vector<8x128xf32>
    %17 = tpu.matmul %7, %16, %cst_13 {dimension_numbers = #tpu.dot_dimension_numbers<[1], [0], [0], [1], [0, 0, 1, 1], [], []>} : vector<8x32xf32>, vector<32x128xf32>, vector<8x128xf32> -> vector<8x128xf32>
    %18 = arith.addf %14, %17 : vector<8x128xf32>
    %19 = arith.index_cast %12 : i32 to index
    %c128 = arith.constant 128 : index
    %20 = vector.load %arg14[%19, %c128] : memref<64x256xf32, #tpu.memory_space<vmem>>, vector<8x128xf32>
    %c1 = arith.constant 1 : index
    %c0_14 = arith.constant 0 : index
    %c0_15 = arith.constant 0 : index
    %21 = vector.load %arg2[%c1, %c0_14, %c0_15] : memref<2x32x128xf32, #tpu.memory_space<vmem>>, vector<1x32x128xf32>
    %22 = vector.shape_cast %21 : vector<1x32x128xf32> to vector<32x128xf32>
    %cst_16 = arith.constant dense<0.000000e+00> : vector<8x128xf32>
    %23 = tpu.matmul %7, %22, %cst_16 {dimension_numbers = #tpu.dot_dimension_numbers<[1], [0], [0], [1], [0, 0, 1, 1], [], []>} : vector<8x32xf32>, vector<32x128xf32>, vector<8x128xf32> -> vector<8x128xf32>
    %24 = arith.addf %20, %23 : vector<8x128xf32>
    %25 = vector.extract_strided_slice %18 {offsets = [0, 0], sizes = [8, 32], strides = [1, 1]} : vector<8x128xf32> to vector<8x32xf32>
    %26 = arith.negf %25 : vector<8x32xf32>
    %27 = math.exp %26 : vector<8x32xf32>
    %cst_17 = arith.constant 1.000000e+00 : f32
    %28 = vector.broadcast %cst_17 : f32 to vector<8x32xf32>
    %29 = arith.addf %28, %27 : vector<8x32xf32>
    %30 = arith.divf %28, %29 : vector<8x32xf32>
    %31 = vector.extract_strided_slice %18 {offsets = [0, 32], sizes = [8, 32], strides = [1, 1]} : vector<8x128xf32> to vector<8x32xf32>
    %32 = arith.negf %31 : vector<8x32xf32>
    %33 = math.exp %32 : vector<8x32xf32>
    %cst_18 = arith.constant 1.000000e+00 : f32
    %34 = vector.broadcast %cst_18 : f32 to vector<8x32xf32>
    %35 = arith.addf %34, %33 : vector<8x32xf32>
    %36 = arith.divf %34, %35 : vector<8x32xf32>
    %37 = vector.extract_strided_slice %18 {offsets = [0, 64], sizes = [8, 32], strides = [1, 1]} : vector<8x128xf32> to vector<8x32xf32>
    %38 = math.tanh %37 : vector<8x32xf32>
    %39 = vector.extract_strided_slice %18 {offsets = [0, 96], sizes = [8, 32], strides = [1, 1]} : vector<8x128xf32> to vector<8x32xf32>
    %40 = arith.negf %39 : vector<8x32xf32>
    %41 = math.exp %40 : vector<8x32xf32>
    %cst_19 = arith.constant 1.000000e+00 : f32
    %42 = vector.broadcast %cst_19 : f32 to vector<8x32xf32>
    %43 = arith.addf %42, %41 : vector<8x32xf32>
    %44 = arith.divf %42, %43 : vector<8x32xf32>
    %45 = arith.mulf %36, %7 : vector<8x32xf32>
    %46 = arith.mulf %30, %38 : vector<8x32xf32>
    %47 = arith.addf %45, %46 : vector<8x32xf32>
    %48 = math.tanh %47 : vector<8x32xf32>
    %49 = arith.mulf %44, %48 : vector<8x32xf32>
    %50 = vector.extract_strided_slice %24 {offsets = [0, 0], sizes = [8, 32], strides = [1, 1]} : vector<8x128xf32> to vector<8x32xf32>
    %51 = arith.negf %50 : vector<8x32xf32>
    %52 = math.exp %51 : vector<8x32xf32>
    %cst_20 = arith.constant 1.000000e+00 : f32
    %53 = vector.broadcast %cst_20 : f32 to vector<8x32xf32>
    %54 = arith.addf %53, %52 : vector<8x32xf32>
    %55 = arith.divf %53, %54 : vector<8x32xf32>
    %56 = vector.extract_strided_slice %24 {offsets = [0, 32], sizes = [8, 32], strides = [1, 1]} : vector<8x128xf32> to vector<8x32xf32>
    %57 = arith.negf %56 : vector<8x32xf32>
    %58 = math.exp %57 : vector<8x32xf32>
    %cst_21 = arith.constant 1.000000e+00 : f32
    %59 = vector.broadcast %cst_21 : f32 to vector<8x32xf32>
    %60 = arith.addf %59, %58 : vector<8x32xf32>
    %61 = arith.divf %59, %60 : vector<8x32xf32>
    %62 = vector.extract_strided_slice %24 {offsets = [0, 64], sizes = [8, 32], strides = [1, 1]} : vector<8x128xf32> to vector<8x32xf32>
    %63 = math.tanh %62 : vector<8x32xf32>
    %64 = vector.extract_strided_slice %24 {offsets = [0, 96], sizes = [8, 32], strides = [1, 1]} : vector<8x128xf32> to vector<8x32xf32>
    %65 = arith.negf %64 : vector<8x32xf32>
    %66 = math.exp %65 : vector<8x32xf32>
    %cst_22 = arith.constant 1.000000e+00 : f32
    %67 = vector.broadcast %cst_22 : f32 to vector<8x32xf32>
    %68 = arith.addf %67, %66 : vector<8x32xf32>
    %69 = arith.divf %67, %68 : vector<8x32xf32>
    %70 = arith.mulf %61, %7 : vector<8x32xf32>
    %71 = arith.mulf %55, %63 : vector<8x32xf32>
    %72 = arith.addf %70, %71 : vector<8x32xf32>
    %73 = math.tanh %72 : vector<8x32xf32>
    %74 = arith.mulf %69, %73 : vector<8x32xf32>
    %c1_i32 = arith.constant 1 : i32
    %c8_i32_23 = arith.constant 8 : i32
    %75 = arith.muli %c1_i32, %c8_i32_23 : i32
    %76 = tpu.assume_multiple %75, 8 : i32
    %c7_i32_24 = arith.constant 7 : i32
    %77 = arith.subi %c7_i32_24, %c1_i32 : i32
    %c8_i32_25 = arith.constant 8 : i32
    %78 = arith.muli %77, %c8_i32_25 : i32
    %79 = tpu.assume_multiple %78, 8 : i32
    %80 = arith.index_cast %76 : i32 to index
    %c0_26 = arith.constant 0 : index
    %81 = vector.load %arg14[%80, %c0_26] : memref<64x256xf32, #tpu.memory_space<vmem>>, vector<8x128xf32>
    %c0_27 = arith.constant 0 : index
    %c0_28 = arith.constant 0 : index
    %c0_29 = arith.constant 0 : index
    %82 = vector.load %arg2[%c0_27, %c0_28, %c0_29] : memref<2x32x128xf32, #tpu.memory_space<vmem>>, vector<1x32x128xf32>
    %83 = vector.shape_cast %82 : vector<1x32x128xf32> to vector<32x128xf32>
    %cst_30 = arith.constant dense<0.000000e+00> : vector<8x128xf32>
    %84 = tpu.matmul %49, %83, %cst_30 {dimension_numbers = #tpu.dot_dimension_numbers<[1], [0], [0], [1], [0, 0, 1, 1], [], []>} : vector<8x32xf32>, vector<32x128xf32>, vector<8x128xf32> -> vector<8x128xf32>
    %85 = arith.addf %81, %84 : vector<8x128xf32>
    %86 = arith.index_cast %79 : i32 to index
    %c128_31 = arith.constant 128 : index
    %87 = vector.load %arg14[%86, %c128_31] : memref<64x256xf32, #tpu.memory_space<vmem>>, vector<8x128xf32>
    %c1_32 = arith.constant 1 : index
    %c0_33 = arith.constant 0 : index
    %c0_34 = arith.constant 0 : index
    %88 = vector.load %arg2[%c1_32, %c0_33, %c0_34] : memref<2x32x128xf32, #tpu.memory_space<vmem>>, vector<1x32x128xf32>
    %89 = vector.shape_cast %88 : vector<1x32x128xf32> to vector<32x128xf32>
    %cst_35 = arith.constant dense<0.000000e+00> : vector<8x128xf32>
    %90 = tpu.matmul %74, %89, %cst_35 {dimension_numbers = #tpu.dot_dimension_numbers<[1], [0], [0], [1], [0, 0, 1, 1], [], []>} : vector<8x32xf32>, vector<32x128xf32>, vector<8x128xf32> -> vector<8x128xf32>
    %91 = arith.addf %87, %90 : vector<8x128xf32>
    %92 = vector.extract_strided_slice %85 {offsets = [0, 0], sizes = [8, 32], strides = [1, 1]} : vector<8x128xf32> to vector<8x32xf32>
    %93 = arith.negf %92 : vector<8x32xf32>
    %94 = math.exp %93 : vector<8x32xf32>
    %cst_36 = arith.constant 1.000000e+00 : f32
    %95 = vector.broadcast %cst_36 : f32 to vector<8x32xf32>
    %96 = arith.addf %95, %94 : vector<8x32xf32>
    %97 = arith.divf %95, %96 : vector<8x32xf32>
    %98 = vector.extract_strided_slice %85 {offsets = [0, 32], sizes = [8, 32], strides = [1, 1]} : vector<8x128xf32> to vector<8x32xf32>
    %99 = arith.negf %98 : vector<8x32xf32>
    %100 = math.exp %99 : vector<8x32xf32>
    %cst_37 = arith.constant 1.000000e+00 : f32
    %101 = vector.broadcast %cst_37 : f32 to vector<8x32xf32>
    %102 = arith.addf %101, %100 : vector<8x32xf32>
    %103 = arith.divf %101, %102 : vector<8x32xf32>
    %104 = vector.extract_strided_slice %85 {offsets = [0, 64], sizes = [8, 32], strides = [1, 1]} : vector<8x128xf32> to vector<8x32xf32>
    %105 = math.tanh %104 : vector<8x32xf32>
    %106 = vector.extract_strided_slice %85 {offsets = [0, 96], sizes = [8, 32], strides = [1, 1]} : vector<8x128xf32> to vector<8x32xf32>
    %107 = arith.negf %106 : vector<8x32xf32>
    %108 = math.exp %107 : vector<8x32xf32>
    %cst_38 = arith.constant 1.000000e+00 : f32
    %109 = vector.broadcast %cst_38 : f32 to vector<8x32xf32>
    %110 = arith.addf %109, %108 : vector<8x32xf32>
    %111 = arith.divf %109, %110 : vector<8x32xf32>
    %112 = arith.mulf %103, %47 : vector<8x32xf32>
    %113 = arith.mulf %97, %105 : vector<8x32xf32>
    %114 = arith.addf %112, %113 : vector<8x32xf32>
    %115 = math.tanh %114 : vector<8x32xf32>
    %116 = arith.mulf %111, %115 : vector<8x32xf32>
    %117 = vector.extract_strided_slice %91 {offsets = [0, 0], sizes = [8, 32], strides = [1, 1]} : vector<8x128xf32> to vector<8x32xf32>
    %118 = arith.negf %117 : vector<8x32xf32>
    %119 = math.exp %118 : vector<8x32xf32>
    %cst_39 = arith.constant 1.000000e+00 : f32
    %120 = vector.broadcast %cst_39 : f32 to vector<8x32xf32>
    %121 = arith.addf %120, %119 : vector<8x32xf32>
    %122 = arith.divf %120, %121 : vector<8x32xf32>
    %123 = vector.extract_strided_slice %91 {offsets = [0, 32], sizes = [8, 32], strides = [1, 1]} : vector<8x128xf32> to vector<8x32xf32>
    %124 = arith.negf %123 : vector<8x32xf32>
    %125 = math.exp %124 : vector<8x32xf32>
    %cst_40 = arith.constant 1.000000e+00 : f32
    %126 = vector.broadcast %cst_40 : f32 to vector<8x32xf32>
    %127 = arith.addf %126, %125 : vector<8x32xf32>
    %128 = arith.divf %126, %127 : vector<8x32xf32>
    %129 = vector.extract_strided_slice %91 {offsets = [0, 64], sizes = [8, 32], strides = [1, 1]} : vector<8x128xf32> to vector<8x32xf32>
    %130 = math.tanh %129 : vector<8x32xf32>
    %131 = vector.extract_strided_slice %91 {offsets = [0, 96], sizes = [8, 32], strides = [1, 1]} : vector<8x128xf32> to vector<8x32xf32>
    %132 = arith.negf %131 : vector<8x32xf32>
    %133 = math.exp %132 : vector<8x32xf32>
    %cst_41 = arith.constant 1.000000e+00 : f32
    %134 = vector.broadcast %cst_41 : f32 to vector<8x32xf32>
    %135 = arith.addf %134, %133 : vector<8x32xf32>
    %136 = arith.divf %134, %135 : vector<8x32xf32>
    %137 = arith.mulf %128, %72 : vector<8x32xf32>
    %138 = arith.mulf %122, %130 : vector<8x32xf32>
    %139 = arith.addf %137, %138 : vector<8x32xf32>
    %140 = math.tanh %139 : vector<8x32xf32>
    %141 = arith.mulf %136, %140 : vector<8x32xf32>
    %c2_i32 = arith.constant 2 : i32
    %c8_i32_42 = arith.constant 8 : i32
    %142 = arith.muli %c2_i32, %c8_i32_42 : i32
    %143 = tpu.assume_multiple %142, 8 : i32
    %c7_i32_43 = arith.constant 7 : i32
    %144 = arith.subi %c7_i32_43, %c2_i32 : i32
    %c8_i32_44 = arith.constant 8 : i32
    %145 = arith.muli %144, %c8_i32_44 : i32
    %146 = tpu.assume_multiple %145, 8 : i32
    %147 = arith.index_cast %143 : i32 to index
    %c0_45 = arith.constant 0 : index
    %148 = vector.load %arg14[%147, %c0_45] : memref<64x256xf32, #tpu.memory_space<vmem>>, vector<8x128xf32>
    %c0_46 = arith.constant 0 : index
    %c0_47 = arith.constant 0 : index
    %c0_48 = arith.constant 0 : index
    %149 = vector.load %arg2[%c0_46, %c0_47, %c0_48] : memref<2x32x128xf32, #tpu.memory_space<vmem>>, vector<1x32x128xf32>
    %150 = vector.shape_cast %149 : vector<1x32x128xf32> to vector<32x128xf32>
    %cst_49 = arith.constant dense<0.000000e+00> : vector<8x128xf32>
    %151 = tpu.matmul %116, %150, %cst_49 {dimension_numbers = #tpu.dot_dimension_numbers<[1], [0], [0], [1], [0, 0, 1, 1], [], []>} : vector<8x32xf32>, vector<32x128xf32>, vector<8x128xf32> -> vector<8x128xf32>
    %152 = arith.addf %148, %151 : vector<8x128xf32>
    %153 = arith.index_cast %146 : i32 to index
    %c128_50 = arith.constant 128 : index
    %154 = vector.load %arg14[%153, %c128_50] : memref<64x256xf32, #tpu.memory_space<vmem>>, vector<8x128xf32>
    %c1_51 = arith.constant 1 : index
    %c0_52 = arith.constant 0 : index
    %c0_53 = arith.constant 0 : index
    %155 = vector.load %arg2[%c1_51, %c0_52, %c0_53] : memref<2x32x128xf32, #tpu.memory_space<vmem>>, vector<1x32x128xf32>
    %156 = vector.shape_cast %155 : vector<1x32x128xf32> to vector<32x128xf32>
    %cst_54 = arith.constant dense<0.000000e+00> : vector<8x128xf32>
    %157 = tpu.matmul %141, %156, %cst_54 {dimension_numbers = #tpu.dot_dimension_numbers<[1], [0], [0], [1], [0, 0, 1, 1], [], []>} : vector<8x32xf32>, vector<32x128xf32>, vector<8x128xf32> -> vector<8x128xf32>
    %158 = arith.addf %154, %157 : vector<8x128xf32>
    %159 = vector.extract_strided_slice %152 {offsets = [0, 0], sizes = [8, 32], strides = [1, 1]} : vector<8x128xf32> to vector<8x32xf32>
    %160 = arith.negf %159 : vector<8x32xf32>
    %161 = math.exp %160 : vector<8x32xf32>
    %cst_55 = arith.constant 1.000000e+00 : f32
    %162 = vector.broadcast %cst_55 : f32 to vector<8x32xf32>
    %163 = arith.addf %162, %161 : vector<8x32xf32>
    %164 = arith.divf %162, %163 : vector<8x32xf32>
    %165 = vector.extract_strided_slice %152 {offsets = [0, 32], sizes = [8, 32], strides = [1, 1]} : vector<8x128xf32> to vector<8x32xf32>
    %166 = arith.negf %165 : vector<8x32xf32>
    %167 = math.exp %166 : vector<8x32xf32>
    %cst_56 = arith.constant 1.000000e+00 : f32
    %168 = vector.broadcast %cst_56 : f32 to vector<8x32xf32>
    %169 = arith.addf %168, %167 : vector<8x32xf32>
    %170 = arith.divf %168, %169 : vector<8x32xf32>
    %171 = vector.extract_strided_slice %152 {offsets = [0, 64], sizes = [8, 32], strides = [1, 1]} : vector<8x128xf32> to vector<8x32xf32>
    %172 = math.tanh %171 : vector<8x32xf32>
    %173 = vector.extract_strided_slice %152 {offsets = [0, 96], sizes = [8, 32], strides = [1, 1]} : vector<8x128xf32> to vector<8x32xf32>
    %174 = arith.negf %173 : vector<8x32xf32>
    %175 = math.exp %174 : vector<8x32xf32>
    %cst_57 = arith.constant 1.000000e+00 : f32
    %176 = vector.broadcast %cst_57 : f32 to vector<8x32xf32>
    %177 = arith.addf %176, %175 : vector<8x32xf32>
    %178 = arith.divf %176, %177 : vector<8x32xf32>
    %179 = arith.mulf %170, %114 : vector<8x32xf32>
    %180 = arith.mulf %164, %172 : vector<8x32xf32>
    %181 = arith.addf %179, %180 : vector<8x32xf32>
    %182 = math.tanh %181 : vector<8x32xf32>
    %183 = arith.mulf %178, %182 : vector<8x32xf32>
    %184 = vector.extract_strided_slice %158 {offsets = [0, 0], sizes = [8, 32], strides = [1, 1]} : vector<8x128xf32> to vector<8x32xf32>
    %185 = arith.negf %184 : vector<8x32xf32>
    %186 = math.exp %185 : vector<8x32xf32>
    %cst_58 = arith.constant 1.000000e+00 : f32
    %187 = vector.broadcast %cst_58 : f32 to vector<8x32xf32>
    %188 = arith.addf %187, %186 : vector<8x32xf32>
    %189 = arith.divf %187, %188 : vector<8x32xf32>
    %190 = vector.extract_strided_slice %158 {offsets = [0, 32], sizes = [8, 32], strides = [1, 1]} : vector<8x128xf32> to vector<8x32xf32>
    %191 = arith.negf %190 : vector<8x32xf32>
    %192 = math.exp %191 : vector<8x32xf32>
    %cst_59 = arith.constant 1.000000e+00 : f32
    %193 = vector.broadcast %cst_59 : f32 to vector<8x32xf32>
    %194 = arith.addf %193, %192 : vector<8x32xf32>
    %195 = arith.divf %193, %194 : vector<8x32xf32>
    %196 = vector.extract_strided_slice %158 {offsets = [0, 64], sizes = [8, 32], strides = [1, 1]} : vector<8x128xf32> to vector<8x32xf32>
    %197 = math.tanh %196 : vector<8x32xf32>
    %198 = vector.extract_strided_slice %158 {offsets = [0, 96], sizes = [8, 32], strides = [1, 1]} : vector<8x128xf32> to vector<8x32xf32>
    %199 = arith.negf %198 : vector<8x32xf32>
    %200 = math.exp %199 : vector<8x32xf32>
    %cst_60 = arith.constant 1.000000e+00 : f32
    %201 = vector.broadcast %cst_60 : f32 to vector<8x32xf32>
    %202 = arith.addf %201, %200 : vector<8x32xf32>
    %203 = arith.divf %201, %202 : vector<8x32xf32>
    %204 = arith.mulf %195, %139 : vector<8x32xf32>
    %205 = arith.mulf %189, %197 : vector<8x32xf32>
    %206 = arith.addf %204, %205 : vector<8x32xf32>
    %207 = math.tanh %206 : vector<8x32xf32>
    %208 = arith.mulf %203, %207 : vector<8x32xf32>
    %c3_i32 = arith.constant 3 : i32
    %c8_i32_61 = arith.constant 8 : i32
    %209 = arith.muli %c3_i32, %c8_i32_61 : i32
    %210 = tpu.assume_multiple %209, 8 : i32
    %c7_i32_62 = arith.constant 7 : i32
    %211 = arith.subi %c7_i32_62, %c3_i32 : i32
    %c8_i32_63 = arith.constant 8 : i32
    %212 = arith.muli %211, %c8_i32_63 : i32
    %213 = tpu.assume_multiple %212, 8 : i32
    %214 = arith.index_cast %210 : i32 to index
    %c0_64 = arith.constant 0 : index
    %215 = vector.load %arg14[%214, %c0_64] : memref<64x256xf32, #tpu.memory_space<vmem>>, vector<8x128xf32>
    %c0_65 = arith.constant 0 : index
    %c0_66 = arith.constant 0 : index
    %c0_67 = arith.constant 0 : index
    %216 = vector.load %arg2[%c0_65, %c0_66, %c0_67] : memref<2x32x128xf32, #tpu.memory_space<vmem>>, vector<1x32x128xf32>
    %217 = vector.shape_cast %216 : vector<1x32x128xf32> to vector<32x128xf32>
    %cst_68 = arith.constant dense<0.000000e+00> : vector<8x128xf32>
    %218 = tpu.matmul %183, %217, %cst_68 {dimension_numbers = #tpu.dot_dimension_numbers<[1], [0], [0], [1], [0, 0, 1, 1], [], []>} : vector<8x32xf32>, vector<32x128xf32>, vector<8x128xf32> -> vector<8x128xf32>
    %219 = arith.addf %215, %218 : vector<8x128xf32>
    %220 = arith.index_cast %213 : i32 to index
    %c128_69 = arith.constant 128 : index
    %221 = vector.load %arg14[%220, %c128_69] : memref<64x256xf32, #tpu.memory_space<vmem>>, vector<8x128xf32>
    %c1_70 = arith.constant 1 : index
    %c0_71 = arith.constant 0 : index
    %c0_72 = arith.constant 0 : index
    %222 = vector.load %arg2[%c1_70, %c0_71, %c0_72] : memref<2x32x128xf32, #tpu.memory_space<vmem>>, vector<1x32x128xf32>
    %223 = vector.shape_cast %222 : vector<1x32x128xf32> to vector<32x128xf32>
    %cst_73 = arith.constant dense<0.000000e+00> : vector<8x128xf32>
    %224 = tpu.matmul %208, %223, %cst_73 {dimension_numbers = #tpu.dot_dimension_numbers<[1], [0], [0], [1], [0, 0, 1, 1], [], []>} : vector<8x32xf32>, vector<32x128xf32>, vector<8x128xf32> -> vector<8x128xf32>
    %225 = arith.addf %221, %224 : vector<8x128xf32>
    %226 = vector.extract_strided_slice %219 {offsets = [0, 0], sizes = [8, 32], strides = [1, 1]} : vector<8x128xf32> to vector<8x32xf32>
    %227 = arith.negf %226 : vector<8x32xf32>
    %228 = math.exp %227 : vector<8x32xf32>
    %cst_74 = arith.constant 1.000000e+00 : f32
    %229 = vector.broadcast %cst_74 : f32 to vector<8x32xf32>
    %230 = arith.addf %229, %228 : vector<8x32xf32>
    %231 = arith.divf %229, %230 : vector<8x32xf32>
    %232 = vector.extract_strided_slice %219 {offsets = [0, 32], sizes = [8, 32], strides = [1, 1]} : vector<8x128xf32> to vector<8x32xf32>
    %233 = arith.negf %232 : vector<8x32xf32>
    %234 = math.exp %233 : vector<8x32xf32>
    %cst_75 = arith.constant 1.000000e+00 : f32
    %235 = vector.broadcast %cst_75 : f32 to vector<8x32xf32>
    %236 = arith.addf %235, %234 : vector<8x32xf32>
    %237 = arith.divf %235, %236 : vector<8x32xf32>
    %238 = vector.extract_strided_slice %219 {offsets = [0, 64], sizes = [8, 32], strides = [1, 1]} : vector<8x128xf32> to vector<8x32xf32>
    %239 = math.tanh %238 : vector<8x32xf32>
    %240 = vector.extract_strided_slice %219 {offsets = [0, 96], sizes = [8, 32], strides = [1, 1]} : vector<8x128xf32> to vector<8x32xf32>
    %241 = arith.negf %240 : vector<8x32xf32>
    %242 = math.exp %241 : vector<8x32xf32>
    %cst_76 = arith.constant 1.000000e+00 : f32
    %243 = vector.broadcast %cst_76 : f32 to vector<8x32xf32>
    %244 = arith.addf %243, %242 : vector<8x32xf32>
    %245 = arith.divf %243, %244 : vector<8x32xf32>
    %246 = arith.mulf %237, %181 : vector<8x32xf32>
    %247 = arith.mulf %231, %239 : vector<8x32xf32>
    %248 = arith.addf %246, %247 : vector<8x32xf32>
    %249 = math.tanh %248 : vector<8x32xf32>
    %250 = arith.mulf %245, %249 : vector<8x32xf32>
    %251 = vector.extract_strided_slice %225 {offsets = [0, 0], sizes = [8, 32], strides = [1, 1]} : vector<8x128xf32> to vector<8x32xf32>
    %252 = arith.negf %251 : vector<8x32xf32>
    %253 = math.exp %252 : vector<8x32xf32>
    %cst_77 = arith.constant 1.000000e+00 : f32
    %254 = vector.broadcast %cst_77 : f32 to vector<8x32xf32>
    %255 = arith.addf %254, %253 : vector<8x32xf32>
    %256 = arith.divf %254, %255 : vector<8x32xf32>
    %257 = vector.extract_strided_slice %225 {offsets = [0, 32], sizes = [8, 32], strides = [1, 1]} : vector<8x128xf32> to vector<8x32xf32>
    %258 = arith.negf %257 : vector<8x32xf32>
    %259 = math.exp %258 : vector<8x32xf32>
    %cst_78 = arith.constant 1.000000e+00 : f32
    %260 = vector.broadcast %cst_78 : f32 to vector<8x32xf32>
    %261 = arith.addf %260, %259 : vector<8x32xf32>
    %262 = arith.divf %260, %261 : vector<8x32xf32>
    %263 = vector.extract_strided_slice %225 {offsets = [0, 64], sizes = [8, 32], strides = [1, 1]} : vector<8x128xf32> to vector<8x32xf32>
    %264 = math.tanh %263 : vector<8x32xf32>
    %265 = vector.extract_strided_slice %225 {offsets = [0, 96], sizes = [8, 32], strides = [1, 1]} : vector<8x128xf32> to vector<8x32xf32>
    %266 = arith.negf %265 : vector<8x32xf32>
    %267 = math.exp %266 : vector<8x32xf32>
    %cst_79 = arith.constant 1.000000e+00 : f32
    %268 = vector.broadcast %cst_79 : f32 to vector<8x32xf32>
    %269 = arith.addf %268, %267 : vector<8x32xf32>
    %270 = arith.divf %268, %269 : vector<8x32xf32>
    %271 = arith.mulf %262, %206 : vector<8x32xf32>
    %272 = arith.mulf %256, %264 : vector<8x32xf32>
    %273 = arith.addf %271, %272 : vector<8x32xf32>
    %274 = math.tanh %273 : vector<8x32xf32>
    %275 = arith.mulf %270, %274 : vector<8x32xf32>
    %c4_i32 = arith.constant 4 : i32
    %c8_i32_80 = arith.constant 8 : i32
    %276 = arith.muli %c4_i32, %c8_i32_80 : i32
    %277 = tpu.assume_multiple %276, 8 : i32
    %c7_i32_81 = arith.constant 7 : i32
    %278 = arith.subi %c7_i32_81, %c4_i32 : i32
    %c8_i32_82 = arith.constant 8 : i32
    %279 = arith.muli %278, %c8_i32_82 : i32
    %280 = tpu.assume_multiple %279, 8 : i32
    %281 = arith.index_cast %277 : i32 to index
    %c0_83 = arith.constant 0 : index
    %282 = vector.load %arg14[%281, %c0_83] : memref<64x256xf32, #tpu.memory_space<vmem>>, vector<8x128xf32>
    %c0_84 = arith.constant 0 : index
    %c0_85 = arith.constant 0 : index
    %c0_86 = arith.constant 0 : index
    %283 = vector.load %arg2[%c0_84, %c0_85, %c0_86] : memref<2x32x128xf32, #tpu.memory_space<vmem>>, vector<1x32x128xf32>
    %284 = vector.shape_cast %283 : vector<1x32x128xf32> to vector<32x128xf32>
    %cst_87 = arith.constant dense<0.000000e+00> : vector<8x128xf32>
    %285 = tpu.matmul %250, %284, %cst_87 {dimension_numbers = #tpu.dot_dimension_numbers<[1], [0], [0], [1], [0, 0, 1, 1], [], []>} : vector<8x32xf32>, vector<32x128xf32>, vector<8x128xf32> -> vector<8x128xf32>
    %286 = arith.addf %282, %285 : vector<8x128xf32>
    %287 = arith.index_cast %280 : i32 to index
    %c128_88 = arith.constant 128 : index
    %288 = vector.load %arg14[%287, %c128_88] : memref<64x256xf32, #tpu.memory_space<vmem>>, vector<8x128xf32>
    %c1_89 = arith.constant 1 : index
    %c0_90 = arith.constant 0 : index
    %c0_91 = arith.constant 0 : index
    %289 = vector.load %arg2[%c1_89, %c0_90, %c0_91] : memref<2x32x128xf32, #tpu.memory_space<vmem>>, vector<1x32x128xf32>
    %290 = vector.shape_cast %289 : vector<1x32x128xf32> to vector<32x128xf32>
    %cst_92 = arith.constant dense<0.000000e+00> : vector<8x128xf32>
    %291 = tpu.matmul %275, %290, %cst_92 {dimension_numbers = #tpu.dot_dimension_numbers<[1], [0], [0], [1], [0, 0, 1, 1], [], []>} : vector<8x32xf32>, vector<32x128xf32>, vector<8x128xf32> -> vector<8x128xf32>
    %292 = arith.addf %288, %291 : vector<8x128xf32>
    %293 = vector.extract_strided_slice %286 {offsets = [0, 0], sizes = [8, 32], strides = [1, 1]} : vector<8x128xf32> to vector<8x32xf32>
    %294 = arith.negf %293 : vector<8x32xf32>
    %295 = math.exp %294 : vector<8x32xf32>
    %cst_93 = arith.constant 1.000000e+00 : f32
    %296 = vector.broadcast %cst_93 : f32 to vector<8x32xf32>
    %297 = arith.addf %296, %295 : vector<8x32xf32>
    %298 = arith.divf %296, %297 : vector<8x32xf32>
    %299 = vector.extract_strided_slice %286 {offsets = [0, 32], sizes = [8, 32], strides = [1, 1]} : vector<8x128xf32> to vector<8x32xf32>
    %300 = arith.negf %299 : vector<8x32xf32>
    %301 = math.exp %300 : vector<8x32xf32>
    %cst_94 = arith.constant 1.000000e+00 : f32
    %302 = vector.broadcast %cst_94 : f32 to vector<8x32xf32>
    %303 = arith.addf %302, %301 : vector<8x32xf32>
    %304 = arith.divf %302, %303 : vector<8x32xf32>
    %305 = vector.extract_strided_slice %286 {offsets = [0, 64], sizes = [8, 32], strides = [1, 1]} : vector<8x128xf32> to vector<8x32xf32>
    %306 = math.tanh %305 : vector<8x32xf32>
    %307 = vector.extract_strided_slice %286 {offsets = [0, 96], sizes = [8, 32], strides = [1, 1]} : vector<8x128xf32> to vector<8x32xf32>
    %308 = arith.negf %307 : vector<8x32xf32>
    %309 = math.exp %308 : vector<8x32xf32>
    %cst_95 = arith.constant 1.000000e+00 : f32
    %310 = vector.broadcast %cst_95 : f32 to vector<8x32xf32>
    %311 = arith.addf %310, %309 : vector<8x32xf32>
    %312 = arith.divf %310, %311 : vector<8x32xf32>
    %313 = arith.mulf %304, %248 : vector<8x32xf32>
    %314 = arith.mulf %298, %306 : vector<8x32xf32>
    %315 = arith.addf %313, %314 : vector<8x32xf32>
    %316 = math.tanh %315 : vector<8x32xf32>
    %317 = arith.mulf %312, %316 : vector<8x32xf32>
    %318 = vector.extract_strided_slice %292 {offsets = [0, 0], sizes = [8, 32], strides = [1, 1]} : vector<8x128xf32> to vector<8x32xf32>
    %319 = arith.negf %318 : vector<8x32xf32>
    %320 = math.exp %319 : vector<8x32xf32>
    %cst_96 = arith.constant 1.000000e+00 : f32
    %321 = vector.broadcast %cst_96 : f32 to vector<8x32xf32>
    %322 = arith.addf %321, %320 : vector<8x32xf32>
    %323 = arith.divf %321, %322 : vector<8x32xf32>
    %324 = vector.extract_strided_slice %292 {offsets = [0, 32], sizes = [8, 32], strides = [1, 1]} : vector<8x128xf32> to vector<8x32xf32>
    %325 = arith.negf %324 : vector<8x32xf32>
    %326 = math.exp %325 : vector<8x32xf32>
    %cst_97 = arith.constant 1.000000e+00 : f32
    %327 = vector.broadcast %cst_97 : f32 to vector<8x32xf32>
    %328 = arith.addf %327, %326 : vector<8x32xf32>
    %329 = arith.divf %327, %328 : vector<8x32xf32>
    %330 = vector.extract_strided_slice %292 {offsets = [0, 64], sizes = [8, 32], strides = [1, 1]} : vector<8x128xf32> to vector<8x32xf32>
    %331 = math.tanh %330 : vector<8x32xf32>
    %332 = vector.extract_strided_slice %292 {offsets = [0, 96], sizes = [8, 32], strides = [1, 1]} : vector<8x128xf32> to vector<8x32xf32>
    %333 = arith.negf %332 : vector<8x32xf32>
    %334 = math.exp %333 : vector<8x32xf32>
    %cst_98 = arith.constant 1.000000e+00 : f32
    %335 = vector.broadcast %cst_98 : f32 to vector<8x32xf32>
    %336 = arith.addf %335, %334 : vector<8x32xf32>
    %337 = arith.divf %335, %336 : vector<8x32xf32>
    %338 = arith.mulf %329, %273 : vector<8x32xf32>
    %339 = arith.mulf %323, %331 : vector<8x32xf32>
    %340 = arith.addf %338, %339 : vector<8x32xf32>
    %341 = math.tanh %340 : vector<8x32xf32>
    %342 = arith.mulf %337, %341 : vector<8x32xf32>
    %c5_i32 = arith.constant 5 : i32
    %c8_i32_99 = arith.constant 8 : i32
    %343 = arith.muli %c5_i32, %c8_i32_99 : i32
    %344 = tpu.assume_multiple %343, 8 : i32
    %c7_i32_100 = arith.constant 7 : i32
    %345 = arith.subi %c7_i32_100, %c5_i32 : i32
    %c8_i32_101 = arith.constant 8 : i32
    %346 = arith.muli %345, %c8_i32_101 : i32
    %347 = tpu.assume_multiple %346, 8 : i32
    %348 = arith.index_cast %344 : i32 to index
    %c0_102 = arith.constant 0 : index
    %349 = vector.load %arg14[%348, %c0_102] : memref<64x256xf32, #tpu.memory_space<vmem>>, vector<8x128xf32>
    %c0_103 = arith.constant 0 : index
    %c0_104 = arith.constant 0 : index
    %c0_105 = arith.constant 0 : index
    %350 = vector.load %arg2[%c0_103, %c0_104, %c0_105] : memref<2x32x128xf32, #tpu.memory_space<vmem>>, vector<1x32x128xf32>
    %351 = vector.shape_cast %350 : vector<1x32x128xf32> to vector<32x128xf32>
    %cst_106 = arith.constant dense<0.000000e+00> : vector<8x128xf32>
    %352 = tpu.matmul %317, %351, %cst_106 {dimension_numbers = #tpu.dot_dimension_numbers<[1], [0], [0], [1], [0, 0, 1, 1], [], []>} : vector<8x32xf32>, vector<32x128xf32>, vector<8x128xf32> -> vector<8x128xf32>
    %353 = arith.addf %349, %352 : vector<8x128xf32>
    %354 = arith.index_cast %347 : i32 to index
    %c128_107 = arith.constant 128 : index
    %355 = vector.load %arg14[%354, %c128_107] : memref<64x256xf32, #tpu.memory_space<vmem>>, vector<8x128xf32>
    %c1_108 = arith.constant 1 : index
    %c0_109 = arith.constant 0 : index
    %c0_110 = arith.constant 0 : index
    %356 = vector.load %arg2[%c1_108, %c0_109, %c0_110] : memref<2x32x128xf32, #tpu.memory_space<vmem>>, vector<1x32x128xf32>
    %357 = vector.shape_cast %356 : vector<1x32x128xf32> to vector<32x128xf32>
    %cst_111 = arith.constant dense<0.000000e+00> : vector<8x128xf32>
    %358 = tpu.matmul %342, %357, %cst_111 {dimension_numbers = #tpu.dot_dimension_numbers<[1], [0], [0], [1], [0, 0, 1, 1], [], []>} : vector<8x32xf32>, vector<32x128xf32>, vector<8x128xf32> -> vector<8x128xf32>
    %359 = arith.addf %355, %358 : vector<8x128xf32>
    %360 = vector.extract_strided_slice %353 {offsets = [0, 0], sizes = [8, 32], strides = [1, 1]} : vector<8x128xf32> to vector<8x32xf32>
    %361 = arith.negf %360 : vector<8x32xf32>
    %362 = math.exp %361 : vector<8x32xf32>
    %cst_112 = arith.constant 1.000000e+00 : f32
    %363 = vector.broadcast %cst_112 : f32 to vector<8x32xf32>
    %364 = arith.addf %363, %362 : vector<8x32xf32>
    %365 = arith.divf %363, %364 : vector<8x32xf32>
    %366 = vector.extract_strided_slice %353 {offsets = [0, 32], sizes = [8, 32], strides = [1, 1]} : vector<8x128xf32> to vector<8x32xf32>
    %367 = arith.negf %366 : vector<8x32xf32>
    %368 = math.exp %367 : vector<8x32xf32>
    %cst_113 = arith.constant 1.000000e+00 : f32
    %369 = vector.broadcast %cst_113 : f32 to vector<8x32xf32>
    %370 = arith.addf %369, %368 : vector<8x32xf32>
    %371 = arith.divf %369, %370 : vector<8x32xf32>
    %372 = vector.extract_strided_slice %353 {offsets = [0, 64], sizes = [8, 32], strides = [1, 1]} : vector<8x128xf32> to vector<8x32xf32>
    %373 = math.tanh %372 : vector<8x32xf32>
    %374 = vector.extract_strided_slice %353 {offsets = [0, 96], sizes = [8, 32], strides = [1, 1]} : vector<8x128xf32> to vector<8x32xf32>
    %375 = arith.negf %374 : vector<8x32xf32>
    %376 = math.exp %375 : vector<8x32xf32>
    %cst_114 = arith.constant 1.000000e+00 : f32
    %377 = vector.broadcast %cst_114 : f32 to vector<8x32xf32>
    %378 = arith.addf %377, %376 : vector<8x32xf32>
    %379 = arith.divf %377, %378 : vector<8x32xf32>
    %380 = arith.mulf %371, %315 : vector<8x32xf32>
    %381 = arith.mulf %365, %373 : vector<8x32xf32>
    %382 = arith.addf %380, %381 : vector<8x32xf32>
    %383 = math.tanh %382 : vector<8x32xf32>
    %384 = arith.mulf %379, %383 : vector<8x32xf32>
    %385 = vector.extract_strided_slice %359 {offsets = [0, 0], sizes = [8, 32], strides = [1, 1]} : vector<8x128xf32> to vector<8x32xf32>
    %386 = arith.negf %385 : vector<8x32xf32>
    %387 = math.exp %386 : vector<8x32xf32>
    %cst_115 = arith.constant 1.000000e+00 : f32
    %388 = vector.broadcast %cst_115 : f32 to vector<8x32xf32>
    %389 = arith.addf %388, %387 : vector<8x32xf32>
    %390 = arith.divf %388, %389 : vector<8x32xf32>
    %391 = vector.extract_strided_slice %359 {offsets = [0, 32], sizes = [8, 32], strides = [1, 1]} : vector<8x128xf32> to vector<8x32xf32>
    %392 = arith.negf %391 : vector<8x32xf32>
    %393 = math.exp %392 : vector<8x32xf32>
    %cst_116 = arith.constant 1.000000e+00 : f32
    %394 = vector.broadcast %cst_116 : f32 to vector<8x32xf32>
    %395 = arith.addf %394, %393 : vector<8x32xf32>
    %396 = arith.divf %394, %395 : vector<8x32xf32>
    %397 = vector.extract_strided_slice %359 {offsets = [0, 64], sizes = [8, 32], strides = [1, 1]} : vector<8x128xf32> to vector<8x32xf32>
    %398 = math.tanh %397 : vector<8x32xf32>
    %399 = vector.extract_strided_slice %359 {offsets = [0, 96], sizes = [8, 32], strides = [1, 1]} : vector<8x128xf32> to vector<8x32xf32>
    %400 = arith.negf %399 : vector<8x32xf32>
    %401 = math.exp %400 : vector<8x32xf32>
    %cst_117 = arith.constant 1.000000e+00 : f32
    %402 = vector.broadcast %cst_117 : f32 to vector<8x32xf32>
    %403 = arith.addf %402, %401 : vector<8x32xf32>
    %404 = arith.divf %402, %403 : vector<8x32xf32>
    %405 = arith.mulf %396, %340 : vector<8x32xf32>
    %406 = arith.mulf %390, %398 : vector<8x32xf32>
    %407 = arith.addf %405, %406 : vector<8x32xf32>
    %408 = math.tanh %407 : vector<8x32xf32>
    %409 = arith.mulf %404, %408 : vector<8x32xf32>
    %c6_i32 = arith.constant 6 : i32
    %c8_i32_118 = arith.constant 8 : i32
    %410 = arith.muli %c6_i32, %c8_i32_118 : i32
    %411 = tpu.assume_multiple %410, 8 : i32
    %c7_i32_119 = arith.constant 7 : i32
    %412 = arith.subi %c7_i32_119, %c6_i32 : i32
    %c8_i32_120 = arith.constant 8 : i32
    %413 = arith.muli %412, %c8_i32_120 : i32
    %414 = tpu.assume_multiple %413, 8 : i32
    %415 = arith.index_cast %411 : i32 to index
    %c0_121 = arith.constant 0 : index
    %416 = vector.load %arg14[%415, %c0_121] : memref<64x256xf32, #tpu.memory_space<vmem>>, vector<8x128xf32>
    %c0_122 = arith.constant 0 : index
    %c0_123 = arith.constant 0 : index
    %c0_124 = arith.constant 0 : index
    %417 = vector.load %arg2[%c0_122, %c0_123, %c0_124] : memref<2x32x128xf32, #tpu.memory_space<vmem>>, vector<1x32x128xf32>
    %418 = vector.shape_cast %417 : vector<1x32x128xf32> to vector<32x128xf32>
    %cst_125 = arith.constant dense<0.000000e+00> : vector<8x128xf32>
    %419 = tpu.matmul %384, %418, %cst_125 {dimension_numbers = #tpu.dot_dimension_numbers<[1], [0], [0], [1], [0, 0, 1, 1], [], []>} : vector<8x32xf32>, vector<32x128xf32>, vector<8x128xf32> -> vector<8x128xf32>
    %420 = arith.addf %416, %419 : vector<8x128xf32>
    %421 = arith.index_cast %414 : i32 to index
    %c128_126 = arith.constant 128 : index
    %422 = vector.load %arg14[%421, %c128_126] : memref<64x256xf32, #tpu.memory_space<vmem>>, vector<8x128xf32>
    %c1_127 = arith.constant 1 : index
    %c0_128 = arith.constant 0 : index
    %c0_129 = arith.constant 0 : index
    %423 = vector.load %arg2[%c1_127, %c0_128, %c0_129] : memref<2x32x128xf32, #tpu.memory_space<vmem>>, vector<1x32x128xf32>
    %424 = vector.shape_cast %423 : vector<1x32x128xf32> to vector<32x128xf32>
    %cst_130 = arith.constant dense<0.000000e+00> : vector<8x128xf32>
    %425 = tpu.matmul %409, %424, %cst_130 {dimension_numbers = #tpu.dot_dimension_numbers<[1], [0], [0], [1], [0, 0, 1, 1], [], []>} : vector<8x32xf32>, vector<32x128xf32>, vector<8x128xf32> -> vector<8x128xf32>
    %426 = arith.addf %422, %425 : vector<8x128xf32>
    %427 = vector.extract_strided_slice %420 {offsets = [0, 0], sizes = [8, 32], strides = [1, 1]} : vector<8x128xf32> to vector<8x32xf32>
    %428 = arith.negf %427 : vector<8x32xf32>
    %429 = math.exp %428 : vector<8x32xf32>
    %cst_131 = arith.constant 1.000000e+00 : f32
    %430 = vector.broadcast %cst_131 : f32 to vector<8x32xf32>
    %431 = arith.addf %430, %429 : vector<8x32xf32>
    %432 = arith.divf %430, %431 : vector<8x32xf32>
    %433 = vector.extract_strided_slice %420 {offsets = [0, 32], sizes = [8, 32], strides = [1, 1]} : vector<8x128xf32> to vector<8x32xf32>
    %434 = arith.negf %433 : vector<8x32xf32>
    %435 = math.exp %434 : vector<8x32xf32>
    %cst_132 = arith.constant 1.000000e+00 : f32
    %436 = vector.broadcast %cst_132 : f32 to vector<8x32xf32>
    %437 = arith.addf %436, %435 : vector<8x32xf32>
    %438 = arith.divf %436, %437 : vector<8x32xf32>
    %439 = vector.extract_strided_slice %420 {offsets = [0, 64], sizes = [8, 32], strides = [1, 1]} : vector<8x128xf32> to vector<8x32xf32>
    %440 = math.tanh %439 : vector<8x32xf32>
    %441 = vector.extract_strided_slice %420 {offsets = [0, 96], sizes = [8, 32], strides = [1, 1]} : vector<8x128xf32> to vector<8x32xf32>
    %442 = arith.negf %441 : vector<8x32xf32>
    %443 = math.exp %442 : vector<8x32xf32>
    %cst_133 = arith.constant 1.000000e+00 : f32
    %444 = vector.broadcast %cst_133 : f32 to vector<8x32xf32>
    %445 = arith.addf %444, %443 : vector<8x32xf32>
    %446 = arith.divf %444, %445 : vector<8x32xf32>
    %447 = arith.mulf %438, %382 : vector<8x32xf32>
    %448 = arith.mulf %432, %440 : vector<8x32xf32>
    %449 = arith.addf %447, %448 : vector<8x32xf32>
    %450 = math.tanh %449 : vector<8x32xf32>
    %451 = arith.mulf %446, %450 : vector<8x32xf32>
    %452 = vector.extract_strided_slice %426 {offsets = [0, 0], sizes = [8, 32], strides = [1, 1]} : vector<8x128xf32> to vector<8x32xf32>
    %453 = arith.negf %452 : vector<8x32xf32>
    %454 = math.exp %453 : vector<8x32xf32>
    %cst_134 = arith.constant 1.000000e+00 : f32
    %455 = vector.broadcast %cst_134 : f32 to vector<8x32xf32>
    %456 = arith.addf %455, %454 : vector<8x32xf32>
    %457 = arith.divf %455, %456 : vector<8x32xf32>
    %458 = vector.extract_strided_slice %426 {offsets = [0, 32], sizes = [8, 32], strides = [1, 1]} : vector<8x128xf32> to vector<8x32xf32>
    %459 = arith.negf %458 : vector<8x32xf32>
    %460 = math.exp %459 : vector<8x32xf32>
    %cst_135 = arith.constant 1.000000e+00 : f32
    %461 = vector.broadcast %cst_135 : f32 to vector<8x32xf32>
    %462 = arith.addf %461, %460 : vector<8x32xf32>
    %463 = arith.divf %461, %462 : vector<8x32xf32>
    %464 = vector.extract_strided_slice %426 {offsets = [0, 64], sizes = [8, 32], strides = [1, 1]} : vector<8x128xf32> to vector<8x32xf32>
    %465 = math.tanh %464 : vector<8x32xf32>
    %466 = vector.extract_strided_slice %426 {offsets = [0, 96], sizes = [8, 32], strides = [1, 1]} : vector<8x128xf32> to vector<8x32xf32>
    %467 = arith.negf %466 : vector<8x32xf32>
    %468 = math.exp %467 : vector<8x32xf32>
    %cst_136 = arith.constant 1.000000e+00 : f32
    %469 = vector.broadcast %cst_136 : f32 to vector<8x32xf32>
    %470 = arith.addf %469, %468 : vector<8x32xf32>
    %471 = arith.divf %469, %470 : vector<8x32xf32>
    %472 = arith.mulf %463, %407 : vector<8x32xf32>
    %473 = arith.mulf %457, %465 : vector<8x32xf32>
    %474 = arith.addf %472, %473 : vector<8x32xf32>
    %475 = math.tanh %474 : vector<8x32xf32>
    %476 = arith.mulf %471, %475 : vector<8x32xf32>
    %c7_i32_137 = arith.constant 7 : i32
    %c8_i32_138 = arith.constant 8 : i32
    %477 = arith.muli %c7_i32_137, %c8_i32_138 : i32
    %478 = tpu.assume_multiple %477, 8 : i32
    %c7_i32_139 = arith.constant 7 : i32
    %479 = arith.subi %c7_i32_139, %c7_i32_137 : i32
    %c8_i32_140 = arith.constant 8 : i32
    %480 = arith.muli %479, %c8_i32_140 : i32
    %481 = tpu.assume_multiple %480, 8 : i32
    %482 = arith.index_cast %478 : i32 to index
    %c0_141 = arith.constant 0 : index
    %483 = vector.load %arg14[%482, %c0_141] : memref<64x256xf32, #tpu.memory_space<vmem>>, vector<8x128xf32>
    %c0_142 = arith.constant 0 : index
    %c0_143 = arith.constant 0 : index
    %c0_144 = arith.constant 0 : index
    %484 = vector.load %arg2[%c0_142, %c0_143, %c0_144] : memref<2x32x128xf32, #tpu.memory_space<vmem>>, vector<1x32x128xf32>
    %485 = vector.shape_cast %484 : vector<1x32x128xf32> to vector<32x128xf32>
    %cst_145 = arith.constant dense<0.000000e+00> : vector<8x128xf32>
    %486 = tpu.matmul %451, %485, %cst_145 {dimension_numbers = #tpu.dot_dimension_numbers<[1], [0], [0], [1], [0, 0, 1, 1], [], []>} : vector<8x32xf32>, vector<32x128xf32>, vector<8x128xf32> -> vector<8x128xf32>
    %487 = arith.addf %483, %486 : vector<8x128xf32>
    %488 = arith.index_cast %481 : i32 to index
    %c128_146 = arith.constant 128 : index
    %489 = vector.load %arg14[%488, %c128_146] : memref<64x256xf32, #tpu.memory_space<vmem>>, vector<8x128xf32>
    %c1_147 = arith.constant 1 : index
    %c0_148 = arith.constant 0 : index
    %c0_149 = arith.constant 0 : index
    %490 = vector.load %arg2[%c1_147, %c0_148, %c0_149] : memref<2x32x128xf32, #tpu.memory_space<vmem>>, vector<1x32x128xf32>
    %491 = vector.shape_cast %490 : vector<1x32x128xf32> to vector<32x128xf32>
    %cst_150 = arith.constant dense<0.000000e+00> : vector<8x128xf32>
    %492 = tpu.matmul %476, %491, %cst_150 {dimension_numbers = #tpu.dot_dimension_numbers<[1], [0], [0], [1], [0, 0, 1, 1], [], []>} : vector<8x32xf32>, vector<32x128xf32>, vector<8x128xf32> -> vector<8x128xf32>
    %493 = arith.addf %489, %492 : vector<8x128xf32>
    %494 = vector.extract_strided_slice %487 {offsets = [0, 0], sizes = [8, 32], strides = [1, 1]} : vector<8x128xf32> to vector<8x32xf32>
    %495 = arith.negf %494 : vector<8x32xf32>
    %496 = math.exp %495 : vector<8x32xf32>
    %cst_151 = arith.constant 1.000000e+00 : f32
    %497 = vector.broadcast %cst_151 : f32 to vector<8x32xf32>
    %498 = arith.addf %497, %496 : vector<8x32xf32>
    %499 = arith.divf %497, %498 : vector<8x32xf32>
    %500 = vector.extract_strided_slice %487 {offsets = [0, 32], sizes = [8, 32], strides = [1, 1]} : vector<8x128xf32> to vector<8x32xf32>
    %501 = arith.negf %500 : vector<8x32xf32>
    %502 = math.exp %501 : vector<8x32xf32>
    %cst_152 = arith.constant 1.000000e+00 : f32
    %503 = vector.broadcast %cst_152 : f32 to vector<8x32xf32>
    %504 = arith.addf %503, %502 : vector<8x32xf32>
    %505 = arith.divf %503, %504 : vector<8x32xf32>
    %506 = vector.extract_strided_slice %487 {offsets = [0, 64], sizes = [8, 32], strides = [1, 1]} : vector<8x128xf32> to vector<8x32xf32>
    %507 = math.tanh %506 : vector<8x32xf32>
    %508 = vector.extract_strided_slice %487 {offsets = [0, 96], sizes = [8, 32], strides = [1, 1]} : vector<8x128xf32> to vector<8x32xf32>
    %509 = arith.negf %508 : vector<8x32xf32>
    %510 = math.exp %509 : vector<8x32xf32>
    %cst_153 = arith.constant 1.000000e+00 : f32
    %511 = vector.broadcast %cst_153 : f32 to vector<8x32xf32>
    %512 = arith.addf %511, %510 : vector<8x32xf32>
    %513 = arith.divf %511, %512 : vector<8x32xf32>
    %514 = arith.mulf %505, %449 : vector<8x32xf32>
    %515 = arith.mulf %499, %507 : vector<8x32xf32>
    %516 = arith.addf %514, %515 : vector<8x32xf32>
    %517 = math.tanh %516 : vector<8x32xf32>
    %518 = arith.mulf %513, %517 : vector<8x32xf32>
    %519 = vector.extract_strided_slice %493 {offsets = [0, 0], sizes = [8, 32], strides = [1, 1]} : vector<8x128xf32> to vector<8x32xf32>
    %520 = arith.negf %519 : vector<8x32xf32>
    %521 = math.exp %520 : vector<8x32xf32>
    %cst_154 = arith.constant 1.000000e+00 : f32
    %522 = vector.broadcast %cst_154 : f32 to vector<8x32xf32>
    %523 = arith.addf %522, %521 : vector<8x32xf32>
    %524 = arith.divf %522, %523 : vector<8x32xf32>
    %525 = vector.extract_strided_slice %493 {offsets = [0, 32], sizes = [8, 32], strides = [1, 1]} : vector<8x128xf32> to vector<8x32xf32>
    %526 = arith.negf %525 : vector<8x32xf32>
    %527 = math.exp %526 : vector<8x32xf32>
    %cst_155 = arith.constant 1.000000e+00 : f32
    %528 = vector.broadcast %cst_155 : f32 to vector<8x32xf32>
    %529 = arith.addf %528, %527 : vector<8x32xf32>
    %530 = arith.divf %528, %529 : vector<8x32xf32>
    %531 = vector.extract_strided_slice %493 {offsets = [0, 64], sizes = [8, 32], strides = [1, 1]} : vector<8x128xf32> to vector<8x32xf32>
    %532 = math.tanh %531 : vector<8x32xf32>
    %533 = vector.extract_strided_slice %493 {offsets = [0, 96], sizes = [8, 32], strides = [1, 1]} : vector<8x128xf32> to vector<8x32xf32>
    %534 = arith.negf %533 : vector<8x32xf32>
    %535 = math.exp %534 : vector<8x32xf32>
    %cst_156 = arith.constant 1.000000e+00 : f32
    %536 = vector.broadcast %cst_156 : f32 to vector<8x32xf32>
    %537 = arith.addf %536, %535 : vector<8x32xf32>
    %538 = arith.divf %536, %537 : vector<8x32xf32>
    %539 = arith.mulf %530, %474 : vector<8x32xf32>
    %540 = arith.mulf %524, %532 : vector<8x32xf32>
    %541 = arith.addf %539, %540 : vector<8x32xf32>
    %542 = math.tanh %541 : vector<8x32xf32>
    %543 = arith.mulf %538, %542 : vector<8x32xf32>
    %c8_i32_157 = arith.constant 8 : i32
    %c0_158 = arith.constant 0 : index
    %c0_159 = arith.constant 0 : index
    %544 = vector.load %arg4[%c0_158, %c0_159] : memref<32x32xf32, #tpu.memory_space<vmem>>, vector<32x32xf32>
    %cst_160 = arith.constant dense<0.000000e+00> : vector<8x32xf32>
    %545 = tpu.matmul %518, %544, %cst_160 {dimension_numbers = #tpu.dot_dimension_numbers<[1], [0], [0], [1], [0, 0, 1, 1], [], []>} : vector<8x32xf32>, vector<32x32xf32>, vector<8x32xf32> -> vector<8x32xf32>
    %c0_161 = arith.constant 0 : index
    %c0_162 = arith.constant 0 : index
    %546 = vector.load %arg5[%c0_161, %c0_162] : memref<32x32xf32, #tpu.memory_space<vmem>>, vector<32x32xf32>
    %cst_163 = arith.constant dense<0.000000e+00> : vector<8x32xf32>
    %547 = tpu.matmul %543, %546, %cst_163 {dimension_numbers = #tpu.dot_dimension_numbers<[1], [0], [0], [1], [0, 0, 1, 1], [], []>} : vector<8x32xf32>, vector<32x32xf32>, vector<8x32xf32> -> vector<8x32xf32>
    %548 = arith.addf %545, %547 : vector<8x32xf32>
    %c0_164 = arith.constant 0 : index
    %c0_165 = arith.constant 0 : index
    %549 = vector.load %arg6[%c0_164, %c0_165] : memref<1x32xf32, #tpu.memory_space<vmem>>, vector<1x32xf32>
    %550 = vector.broadcast %549 : vector<1x32xf32> to vector<8x32xf32>
    %551 = arith.addf %548, %550 : vector<8x32xf32>
    %c0_166 = arith.constant 0 : index
    %c0_167 = arith.constant 0 : index
    %552 = vector.load %arg7[%c0_166, %c0_167] : memref<32x32xf32, #tpu.memory_space<vmem>>, vector<32x32xf32>
    %cst_168 = arith.constant dense<0.000000e+00> : vector<8x32xf32>
    %553 = tpu.matmul %551, %552, %cst_168 {dimension_numbers = #tpu.dot_dimension_numbers<[1], [0], [0], [1], [0, 0, 1, 1], [], []>} : vector<8x32xf32>, vector<32x32xf32>, vector<8x32xf32> -> vector<8x32xf32>
    %c0_169 = arith.constant 0 : index
    %c0_170 = arith.constant 0 : index
    %554 = vector.load %arg8[%c0_169, %c0_170] : memref<1x32xf32, #tpu.memory_space<vmem>>, vector<1x32xf32>
    %555 = vector.broadcast %554 : vector<1x32xf32> to vector<8x32xf32>
    %556 = arith.addf %553, %555 : vector<8x32xf32>
    %c0_171 = arith.constant 0 : index
    %c0_172 = arith.constant 0 : index
    %557 = vector.load %arg9[%c0_171, %c0_172] : memref<32x32xf32, #tpu.memory_space<vmem>>, vector<32x32xf32>
    %cst_173 = arith.constant dense<0.000000e+00> : vector<8x32xf32>
    %558 = tpu.matmul %556, %557, %cst_173 {dimension_numbers = #tpu.dot_dimension_numbers<[1], [0], [0], [1], [0, 0, 1, 1], [], []>} : vector<8x32xf32>, vector<32x32xf32>, vector<8x32xf32> -> vector<8x32xf32>
    %c0_174 = arith.constant 0 : index
    %c0_175 = arith.constant 0 : index
    %559 = vector.load %arg10[%c0_174, %c0_175] : memref<32x32xf32, #tpu.memory_space<vmem>>, vector<32x32xf32>
    %cst_176 = arith.constant dense<0.000000e+00> : vector<8x32xf32>
    %560 = tpu.matmul %518, %559, %cst_176 {dimension_numbers = #tpu.dot_dimension_numbers<[1], [0], [0], [1], [0, 0, 1, 1], [], []>} : vector<8x32xf32>, vector<32x32xf32>, vector<8x32xf32> -> vector<8x32xf32>
    %561 = arith.addf %558, %560 : vector<8x32xf32>
    %c0_177 = arith.constant 0 : index
    %c0_178 = arith.constant 0 : index
    %562 = vector.load %arg11[%c0_177, %c0_178] : memref<32x32xf32, #tpu.memory_space<vmem>>, vector<32x32xf32>
    %cst_179 = arith.constant dense<0.000000e+00> : vector<8x32xf32>
    %563 = tpu.matmul %543, %562, %cst_179 {dimension_numbers = #tpu.dot_dimension_numbers<[1], [0], [0], [1], [0, 0, 1, 1], [], []>} : vector<8x32xf32>, vector<32x32xf32>, vector<8x32xf32> -> vector<8x32xf32>
    %564 = arith.addf %561, %563 : vector<8x32xf32>
    %c0_180 = arith.constant 0 : index
    %c0_181 = arith.constant 0 : index
    %565 = vector.load %arg12[%c0_180, %c0_181] : memref<1x32xf32, #tpu.memory_space<vmem>>, vector<1x32xf32>
    %566 = vector.broadcast %565 : vector<1x32xf32> to vector<8x32xf32>
    %567 = arith.addf %564, %566 : vector<8x32xf32>
    %c0_182 = arith.constant 0 : index
    %c0_183 = arith.constant 0 : index
    %568 = vector.load %arg13[%c0_182, %c0_183] : memref<8x32xf32, #tpu.memory_space<vmem>>, vector<8x32xf32>
    tpu.vector_store %arg13[%c0_182, %c0_183], %567 {strides = array<i32>} : memref<8x32xf32, #tpu.memory_space<vmem>>, vector<8x32xf32>,
    return
  }
}

</mosaic_0001>

<llo_original>
// kernel: tpu_custom_call.1
$region0: #{tpu_custom_call.1}
  #allocation0 [shape = 'u32[]', space=smem, size = 0x4, offset = 0x4, fixed_abs, tag = 'smem constant byte address 0x4 - core index']
  #allocation1 [shape = 'u32[72,128]{1,0:T(1,128)}', space=vmem, size = 0x9000, scoped, tag = 'internal scratch']
  #allocation2 [shape = 'f32[64,256]{1,0:T(8,128)}', space=vmem, size = 0x10000, scoped, tag = 'scratch operand']
  %s0 = inlined_call_operand.vmem [shape: f32[64,16], index: 0, kind: input, shape index: {}]
  %s1 = inlined_call_operand.hbm [shape: f32[16,256], index: 1, kind: input, shape index: {}]
  %s2 = inlined_call_operand.vmem [shape: f32[2,32,128], index: 2, kind: input, shape index: {}]
  %s3 = inlined_call_operand.vmem [shape: f32[1,256], index: 3, kind: input, shape index: {}]
  %s4 = inlined_call_operand.hbm [shape: f32[32,32], index: 4, kind: input, shape index: {}]
  %s5 = inlined_call_operand.hbm [shape: f32[32,32], index: 5, kind: input, shape index: {}]
  %s6 = inlined_call_operand.vmem [shape: f32[1,32], index: 6, kind: input, shape index: {}]
  %s7 = inlined_call_operand.hbm [shape: f32[32,32], index: 7, kind: input, shape index: {}]
  %s8 = inlined_call_operand.vmem [shape: f32[1,32], index: 8, kind: input, shape index: {}]
  %s9 = inlined_call_operand.hbm [shape: f32[32,32], index: 9, kind: input, shape index: {}]
  %s10 = inlined_call_operand.hbm [shape: f32[32,32], index: 10, kind: input, shape index: {}]
  %s11 = inlined_call_operand.hbm [shape: f32[32,32], index: 11, kind: input, shape index: {}]
  %s12 = inlined_call_operand.vmem [shape: f32[1,32], index: 12, kind: input, shape index: {}]
  %s13 = inlined_call_operand.hbm [shape: f32[8,32], index: 13, kind: output, shape index: {}]
  %s14 = sld [smem:[#allocation0]]
  $region90: #{tpu_custom_call.1} parent=0
    _
  %s16 = ssub.s32 1, %s14
  %s17 = scalar_select 0, %s16, %s14
  $region1: #{tpu_custom_call.1} parent=0
    #allocation3 [shape = 'u8[16384]{0}', space=vmem, size = 0x4000, scoped, tag = 'input window, operand 1, single buffered']
    #allocation4 [shape = 's32[1]{0}', space=sflag, size = 0x4, scoped, tag = 'scoped memory for tpu_custom_call.1']
    #allocation5 [shape = 's32[1]{0}', space=sflag, size = 0x4, scoped, tag = 'scoped memory for tpu_custom_call.1']
    #allocation6 [shape = 'u8[16384]{0}', space=vmem, size = 0x4000, scoped, tag = 'input window, operand 4, single buffered']
    #allocation7 [shape = 's32[1]{0}', space=sflag, size = 0x4, scoped, tag = 'scoped memory for tpu_custom_call.1']
    #allocation8 [shape = 'u8[16384]{0}', space=vmem, size = 0x4000, scoped, tag = 'input window, operand 5, single buffered']
    #allocation9 [shape = 'u8[16384]{0}', space=vmem, size = 0x4000, scoped, tag = 'input window, operand 7, single buffered']
    #allocation10 [shape = 's32[1]{0}', space=sflag, size = 0x4, scoped, tag = 'scoped memory for tpu_custom_call.1']
    #allocation11 [shape = 'u8[16384]{0}', space=vmem, size = 0x4000, scoped, tag = 'input window, operand 9, single buffered']
    #allocation12 [shape = 'u8[16384]{0}', space=vmem, size = 0x4000, scoped, tag = 'input window, operand 10, single buffered']
    #allocation13 [shape = 's32[1]{0}', space=sflag, size = 0x4, scoped, tag = 'scoped memory for tpu_custom_call.1']
    #allocation14 [shape = 'u8[16384]{0}', space=vmem, size = 0x4000, scoped, tag = 'input window, operand 11, single buffered']
    #allocation15 [shape = 'u8[4096]{0}', space=vmem, size = 0x1000, scoped, tag = 'output window, operand 0, single buffered']
    %18 = vsyncpa [#allocation4], 0
    %19 = vsyncpa [#allocation7], 0
    %20 = vsyncpa [#allocation10], 0
    %21 = vsyncpa [#allocation13], 0
    %22 = vsyncpa [#allocation5], 0
    // Predicated region
    $region2: #{tpu_custom_call.1} parent=1 // pred_check
      _
    $region3: #{tpu_custom_call.1} parent=1 // pred_check_branch
      %24 = sbr.rel (0) target = $region5
    $region4: #{tpu_custom_call.1} parent=1 // pred_region
      _
    $region5: #{tpu_custom_call.1} parent=1 // pred_fallthru
      _
    // Predicated region
    $region6: #{tpu_custom_call.1} parent=1 // pred_check
      _
    $region7: #{tpu_custom_call.1} parent=1 // pred_check_branch
      %26 = sbr.rel (0) target = $region9
    $region8: #{tpu_custom_call.1} parent=1 // pred_region
      %28 = vsyncadd [#allocation4], 0
      %s29 = sshll.u32 %s1, 4
      %s30 = int_to_ptr.hbm [resolvable:$true] %s29
      %s31 = sshll.u32 [#allocation3], 4
      %s32 = int_to_ptr.vmem [resolvable:$true] %s31
      %37 = dma.hbm_to_vmem [thread:$0]  %s30, 512, %s32, [#allocation4], 256, 256, 16
    $region9: #{tpu_custom_call.1} parent=1 // pred_fallthru
      _
    // Predicated region
    $region10: #{tpu_custom_call.1} parent=1 // pred_check
      _
    $region11: #{tpu_custom_call.1} parent=1 // pred_check_branch
      %39 = sbr.rel (0) target = $region13
    $region12: #{tpu_custom_call.1} parent=1 // pred_region
      _
    $region13: #{tpu_custom_call.1} parent=1 // pred_fallthru
      _
    // Predicated region
    $region14: #{tpu_custom_call.1} parent=1 // pred_check
      _
    $region15: #{tpu_custom_call.1} parent=1 // pred_check_branch
      %41 = sbr.rel (0) target = $region17
    $region16: #{tpu_custom_call.1} parent=1 // pred_region
      _
    $region17: #{tpu_custom_call.1} parent=1 // pred_fallthru
      _
    // Predicated region
    $region18: #{tpu_custom_call.1} parent=1 // pred_check
      _
    $region19: #{tpu_custom_call.1} parent=1 // pred_check_branch
      %43 = sbr.rel (0) target = $region21
    $region20: #{tpu_custom_call.1} parent=1 // pred_region
      %45 = vsyncadd [#allocation7], 0
      %s46 = sshll.u32 %s4, 4
      %s47 = int_to_ptr.hbm [resolvable:$true] %s46
      %s48 = sshll.u32 [#allocation6], 4
      %s49 = int_to_ptr.vmem [resolvable:$true] %s48
      %54 = dma.hbm_to_vmem [thread:$0]  %s47, 512, %s49, [#allocation7], 128, 128, 8
    $region21: #{tpu_custom_call.1} parent=1 // pred_fallthru
      _
    // Predicated region
    $region22: #{tpu_custom_call.1} parent=1 // pred_check
      _
    $region23: #{tpu_custom_call.1} parent=1 // pred_check_branch
      %56 = sbr.rel (0) target = $region25
    $region24: #{tpu_custom_call.1} parent=1 // pred_region
      %58 = vsyncadd [#allocation7], 0
      %s59 = sshll.u32 %s5, 4
      %s60 = int_to_ptr.hbm [resolvable:$true] %s59
      %s61 = sshll.u32 [#allocation8], 4
      %s62 = int_to_ptr.vmem [resolvable:$true] %s61
      %67 = dma.hbm_to_vmem [thread:$0]  %s60, 512, %s62, [#allocation7], 128, 128, 8
    $region25: #{tpu_custom_call.1} parent=1 // pred_fallthru
      _
    // Predicated region
    $region26: #{tpu_custom_call.1} parent=1 // pred_check
      _
    $region27: #{tpu_custom_call.1} parent=1 // pred_check_branch
      %69 = sbr.rel (0) target = $region29
    $region28: #{tpu_custom_call.1} parent=1 // pred_region
      _
    $region29: #{tpu_custom_call.1} parent=1 // pred_fallthru
      _
    // Predicated region
    $region30: #{tpu_custom_call.1} parent=1 // pred_check
      _
    $region31: #{tpu_custom_call.1} parent=1 // pred_check_branch
      %71 = sbr.rel (0) target = $region33
    $region32: #{tpu_custom_call.1} parent=1 // pred_region
      %73 = vsyncadd [#allocation10], 0
      %s74 = sshll.u32 %s7, 4
      %s75 = int_to_ptr.hbm [resolvable:$true] %s74
      %s76 = sshll.u32 [#allocation9], 4
      %s77 = int_to_ptr.vmem [resolvable:$true] %s76
      %82 = dma.hbm_to_vmem [thread:$0]  %s75, 512, %s77, [#allocation10], 128, 128, 8
    $region33: #{tpu_custom_call.1} parent=1 // pred_fallthru
      _
    // Predicated region
    $region34: #{tpu_custom_call.1} parent=1 // pred_check
      _
    $region35: #{tpu_custom_call.1} parent=1 // pred_check_branch
      %84 = sbr.rel (0) target = $region37
    $region36: #{tpu_custom_call.1} parent=1 // pred_region
      _
    $region37: #{tpu_custom_call.1} parent=1 // pred_fallthru
      _
    // Predicated region
    $region38: #{tpu_custom_call.1} parent=1 // pred_check
      _
    $region39: #{tpu_custom_call.1} parent=1 // pred_check_branch
      %86 = sbr.rel (0) target = $region41
    $region40: #{tpu_custom_call.1} parent=1 // pred_region
      %88 = vsyncadd [#allocation10], 0
      %s89 = sshll.u32 %s9, 4
      %s90 = int_to_ptr.hbm [resolvable:$true] %s89
      %s91 = sshll.u32 [#allocation11], 4
      %s92 = int_to_ptr.vmem [resolvable:$true] %s91
      %97 = dma.hbm_to_vmem [thread:$0]  %s90, 512, %s92, [#allocation10], 128, 128, 8
    $region41: #{tpu_custom_call.1} parent=1 // pred_fallthru
      _
    // Predicated region
    $region42: #{tpu_custom_call.1} parent=1 // pred_check
      _
    $region43: #{tpu_custom_call.1} parent=1 // pred_check_branch
      %99 = sbr.rel (0) target = $region45
    $region44: #{tpu_custom_call.1} parent=1 // pred_region
      %101 = vsyncadd [#allocation13], 0
      %s102 = sshll.u32 %s10, 4
      %s103 = int_to_ptr.hbm [resolvable:$true] %s102
      %s104 = sshll.u32 [#allocation12], 4
      %s105 = int_to_ptr.vmem [resolvable:$true] %s104
      %110 = dma.hbm_to_vmem [thread:$0]  %s103, 512, %s105, [#allocation13], 128, 128, 8
    $region45: #{tpu_custom_call.1} parent=1 // pred_fallthru
      _
    // Predicated region
    $region46: #{tpu_custom_call.1} parent=1 // pred_check
      _
    $region47: #{tpu_custom_call.1} parent=1 // pred_check_branch
      %112 = sbr.rel (0) target = $region49
    $region48: #{tpu_custom_call.1} parent=1 // pred_region
      %114 = vsyncadd [#allocation13], 0
      %s115 = sshll.u32 %s11, 4
      %s116 = int_to_ptr.hbm [resolvable:$true] %s115
      %s117 = sshll.u32 [#allocation14], 4
      %s118 = int_to_ptr.vmem [resolvable:$true] %s117
      %123 = dma.hbm_to_vmem [thread:$0]  %s116, 512, %s118, [#allocation13], 128, 128, 8
    $region49: #{tpu_custom_call.1} parent=1 // pred_fallthru
      _
    // Predicated region
    $region50: #{tpu_custom_call.1} parent=1 // pred_check
      _
    $region51: #{tpu_custom_call.1} parent=1 // pred_check_branch
      %125 = sbr.rel (0) target = $region53
    $region52: #{tpu_custom_call.1} parent=1 // pred_region
      _
    $region53: #{tpu_custom_call.1} parent=1 // pred_fallthru
      _
    // Predicated region
    $region54: #{tpu_custom_call.1} parent=1 // pred_check
      _
    $region55: #{tpu_custom_call.1} parent=1 // pred_check_branch
      %127 = sbr.rel (0) target = $region57
    $region56: #{tpu_custom_call.1} parent=1 // pred_region
      %129 = dma.done [#allocation4], 512
    $region57: #{tpu_custom_call.1} parent=1 // pred_fallthru
      _
    // Predicated region
    $region58: #{tpu_custom_call.1} parent=1 // pred_check
      _
    $region59: #{tpu_custom_call.1} parent=1 // pred_check_branch
      %131 = sbr.rel (0) target = $region61
    $region60: #{tpu_custom_call.1} parent=1 // pred_region
      %133 = dma.done [#allocation7], 512
    $region61: #{tpu_custom_call.1} parent=1 // pred_fallthru
      _
    // Predicated region
    $region62: #{tpu_custom_call.1} parent=1 // pred_check
      _
    $region63: #{tpu_custom_call.1} parent=1 // pred_check_branch
      %135 = sbr.rel (0) target = $region65
    $region64: #{tpu_custom_call.1} parent=1 // pred_region
      %137 = dma.done [#allocation7], 512
    $region65: #{tpu_custom_call.1} parent=1 // pred_fallthru
      _
    // Predicated region
    $region66: #{tpu_custom_call.1} parent=1 // pred_check
      _
    $region67: #{tpu_custom_call.1} parent=1 // pred_check_branch
      %139 = sbr.rel (0) target = $region69
    $region68: #{tpu_custom_call.1} parent=1 // pred_region
      %141 = dma.done [#allocation10], 512
    $region69: #{tpu_custom_call.1} parent=1 // pred_fallthru
      _
    // Predicated region
    $region70: #{tpu_custom_call.1} parent=1 // pred_check
      _
    $region71: #{tpu_custom_call.1} parent=1 // pred_check_branch
      %143 = sbr.rel (0) target = $region73
    $region72: #{tpu_custom_call.1} parent=1 // pred_region
      %145 = dma.done [#allocation10], 512
    $region73: #{tpu_custom_call.1} parent=1 // pred_fallthru
      _
    // Predicated region
    $region74: #{tpu_custom_call.1} parent=1 // pred_check
      _
    $region75: #{tpu_custom_call.1} parent=1 // pred_check_branch
      %147 = sbr.rel (0) target = $region77
    $region76: #{tpu_custom_call.1} parent=1 // pred_region
      %149 = dma.done [#allocation13], 512
    $region77: #{tpu_custom_call.1} parent=1 // pred_fallthru
      _
    // Predicated region
    $region78: #{tpu_custom_call.1} parent=1 // pred_check
      _
    $region79: #{tpu_custom_call.1} parent=1 // pred_check_branch
      %151 = sbr.rel (0) target = $region81
    $region80: #{tpu_custom_call.1} parent=1 // pred_region
      %153 = dma.done [#allocation13], 512
    $region81: #{tpu_custom_call.1} parent=1 // pred_fallthru
      _
    %v154 = vld [vmem:[%s0] sm:$0xff]
    %v155 = vld [vmem:[%s0 + $0x8] sm:$0xff]
    %v156 = vld [vmem:[%s0 + $0x10] sm:$0xff]
    %v157 = vld [vmem:[%s0 + $0x18] sm:$0xff]
    %v158 = vld [vmem:[%s0 + $0x20] sm:$0xff]
    %v159 = vld [vmem:[%s0 + $0x28] sm:$0xff]
    %v160 = vld [vmem:[%s0 + $0x30] sm:$0xff]
    %v161 = vld [vmem:[%s0 + $0x38] sm:$0xff]
    %v162 = vld [vmem:[#allocation3] sm:$0xff]
    %v163 = vld [vmem:[#allocation3 + $0x8] sm:$0xff]
    %v164 = vld [vmem:[#allocation3 + $0x10] sm:$0xff]
    %v165 = vld [vmem:[#allocation3 + $0x18] sm:$0xff]
    %v166 = vld [vmem:[%s3] sm:$0x3]
    %v168 = vperm.slane %v166, 0
    %v169 = vperm.slane %v166, 1
    %vm172 = vcmask 130048
    %v174 = vsel %vm172, %v154, 0
    %v177 = vsel %vm172, %v155, 0
    %v180 = vsel %vm172, %v156, 0
    %v183 = vsel %vm172, %v157, 0
    %v186 = vsel %vm172, %v158, 0
    %v189 = vsel %vm172, %v159, 0
    %v192 = vsel %vm172, %v160, 0
    %v195 = vsel %vm172, %v161, 0
    %197 = vmatpush.msra.mxu0 0.0
    %198 = vmatpush.msra.mxu0 0.0
    %199 = vmatpush.msra.mxu0 0.0
    %200 = vmatpush.msra.mxu0 0.0
    %201 = vmatpush.msra.mxu0 0.0
    %202 = vmatpush.msra.mxu0 0.0
    %203 = vmatpush.msra.mxu0 0.0
    %204 = vmatpush.msra.mxu0 0.0
    %205 = vmatpush.msra.mxu0 0.0
    %206 = vmatpush.msra.mxu0 0.0
    %207 = vmatpush.msra.mxu0 0.0
    %208 = vmatpush.msra.mxu0 0.0
    %209 = vmatpush.msra.mxu0 0.0
    %210 = vmatpush.msra.mxu0 0.0
    %211 = vmatpush.msra.mxu0 %v164
    %212 = vmatpush.msra.mxu0 %v162
    %213 = vmatmul.f32.gmra.mxu0 %v174
    %v214 = vpop.f32.mrf.mxu0
    %v215 = vadd.f32 %v168, %v214
    %216 = vmatmul.f32.gmra.mxu0 %v177
    %v217 = vpop.f32.mrf.mxu0
    %v218 = vadd.f32 %v168, %v217
    %219 = vmatmul.f32.gmra.mxu0 %v180
    %v220 = vpop.f32.mrf.mxu0
    %v221 = vadd.f32 %v168, %v220
    %222 = vmatmul.f32.gmra.mxu0 %v183
    %v223 = vpop.f32.mrf.mxu0
    %v224 = vadd.f32 %v168, %v223
    %225 = vmatmul.f32.gmra.mxu0 %v186
    %v226 = vpop.f32.mrf.mxu0
    %v227 = vadd.f32 %v168, %v226
    %228 = vmatmul.f32.gmra.mxu0 %v189
    %v229 = vpop.f32.mrf.mxu0
    %v230 = vadd.f32 %v168, %v229
    %231 = vmatmul.f32.gmra.mxu0 %v192
    %v232 = vpop.f32.mrf.mxu0
    %v233 = vadd.f32 %v168, %v232
    %234 = vmatmul.f32.gmra.mxu0 %v195
    %v235 = vpop.f32.mrf.mxu0
    %v236 = vadd.f32 %v168, %v235
    %237 = vdwg.mxu0
    %238 = vmatpush.msra.mxu0 0.0
    %239 = vmatpush.msra.mxu0 0.0
    %240 = vmatpush.msra.mxu0 0.0
    %241 = vmatpush.msra.mxu0 0.0
    %242 = vmatpush.msra.mxu0 0.0
    %243 = vmatpush.msra.mxu0 0.0
    %244 = vmatpush.msra.mxu0 0.0
    %245 = vmatpush.msra.mxu0 0.0
    %246 = vmatpush.msra.mxu0 0.0
    %247 = vmatpush.msra.mxu0 0.0
    %248 = vmatpush.msra.mxu0 0.0
    %249 = vmatpush.msra.mxu0 0.0
    %250 = vmatpush.msra.mxu0 0.0
    %251 = vmatpush.msra.mxu0 0.0
    %252 = vmatpush.msra.mxu0 %v165
    %253 = vmatpush.msra.mxu0 %v163
    %254 = vmatmul.f32.gmra.mxu0 %v174
    %v255 = vpop.f32.mrf.mxu0
    %v256 = vadd.f32 %v169, %v255
    %257 = vmatmul.f32.gmra.mxu0 %v177
    %v258 = vpop.f32.mrf.mxu0
    %v259 = vadd.f32 %v169, %v258
    %260 = vmatmul.f32.gmra.mxu0 %v180
    %v261 = vpop.f32.mrf.mxu0
    %v262 = vadd.f32 %v169, %v261
    %263 = vmatmul.f32.gmra.mxu0 %v183
    %v264 = vpop.f32.mrf.mxu0
    %v265 = vadd.f32 %v169, %v264
    %266 = vmatmul.f32.gmra.mxu0 %v186
    %v267 = vpop.f32.mrf.mxu0
    %v268 = vadd.f32 %v169, %v267
    %269 = vmatmul.f32.gmra.mxu0 %v189
    %v270 = vpop.f32.mrf.mxu0
    %v271 = vadd.f32 %v169, %v270
    %272 = vmatmul.f32.gmra.mxu0 %v192
    %v273 = vpop.f32.mrf.mxu0
    %v274 = vadd.f32 %v169, %v273
    %275 = vmatmul.f32.gmra.mxu0 %v195
    %v276 = vpop.f32.mrf.mxu0
    %v277 = vadd.f32 %v169, %v276
    %278 = vdwg.mxu0
    %279 = vst [vmem:[#allocation2] sm:$0xff] %v215
    %280 = vst [vmem:[#allocation2 + $0x8] sm:$0xff] %v256
    %281 = vst [vmem:[#allocation2 + $0x10] sm:$0xff] %v218
    %282 = vst [vmem:[#allocation2 + $0x18] sm:$0xff] %v259
    %283 = vst [vmem:[#allocation2 + $0x20] sm:$0xff] %v221
    %284 = vst [vmem:[#allocation2 + $0x28] sm:$0xff] %v262
    %285 = vst [vmem:[#allocation2 + $0x30] sm:$0xff] %v224
    %286 = vst [vmem:[#allocation2 + $0x38] sm:$0xff] %v265
    %287 = vst [vmem:[#allocation2 + $0x40] sm:$0xff] %v227
    %288 = vst [vmem:[#allocation2 + $0x48] sm:$0xff] %v268
    %289 = vst [vmem:[#allocation2 + $0x50] sm:$0xff] %v230
    %290 = vst [vmem:[#allocation2 + $0x58] sm:$0xff] %v271
    %291 = vst [vmem:[#allocation2 + $0x60] sm:$0xff] %v233
    %292 = vst [vmem:[#allocation2 + $0x68] sm:$0xff] %v274
    %293 = vst [vmem:[#allocation2 + $0x70] sm:$0xff] %v236
    %294 = vst [vmem:[#allocation2 + $0x78] sm:$0xff] %v277
    %s295 = smul.u32 0, 2
    %s296 = smul.addr %s295, 8
    %s297 = scalar_lea.vmem [#allocation2], %s296
    %v298 = vld [vmem:[%s297] sm:$0xff]
    %v299 = vld [vmem:[%s2] sm:$0xff]
    %v300 = vld [vmem:[%s2 + $0x8] sm:$0xff]
    %v301 = vld [vmem:[%s2 + $0x10] sm:$0xff]
    %v302 = vld [vmem:[%s2 + $0x18] sm:$0xff]
    %vm303 = vcmask 261120
    %v305 = vsel %vm303, 0.0, 0
    %307 = vmatpush.msra.mxu0 0.0
    %308 = vmatpush.msra.mxu0 0.0
    %309 = vmatpush.msra.mxu0 0.0
    %310 = vmatpush.msra.mxu0 0.0
    %311 = vmatpush.msra.mxu0 0.0
    %312 = vmatpush.msra.mxu0 0.0
    %313 = vmatpush.msra.mxu0 0.0
    %314 = vmatpush.msra.mxu0 0.0
    %315 = vmatpush.msra.mxu0 0.0
    %316 = vmatpush.msra.mxu0 0.0
    %317 = vmatpush.msra.mxu0 0.0
    %318 = vmatpush.msra.mxu0 0.0
    %319 = vmatpush.msra.mxu0 %v302
    %320 = vmatpush.msra.mxu0 %v301
    %321 = vmatpush.msra.mxu0 %v300
    %322 = vmatpush.msra.mxu0 %v299
    %323 = vmatmul.f32.gmra.mxu0 %v305
    %v324 = vpop.f32.mrf.mxu0
    %v325 = vadd.f32 0.0, %v324
    %326 = vdwg.mxu0
    %v327 = vadd.f32 %v298, %v325
    %s328 = smul.u32 7, 2
    %s329 = smul.addr %s328, 8
    %s330 = scalar_lea.vmem [#allocation2], %s329
    %v331 = vld [vmem:[%s330 + $0x8] sm:$0xff]
    %s332 = scalar_lea.vmem %s2, 32
    %v333 = vld [vmem:[%s332] sm:$0xff]
    %v334 = vld [vmem:[%s332 + $0x8] sm:$0xff]
    %v335 = vld [vmem:[%s332 + $0x10] sm:$0xff]
    %v336 = vld [vmem:[%s332 + $0x18] sm:$0xff]
    %337 = vmatpush.msra.mxu0 0.0
    %338 = vmatpush.msra.mxu0 0.0
    %339 = vmatpush.msra.mxu0 0.0
    %340 = vmatpush.msra.mxu0 0.0
    %341 = vmatpush.msra.mxu0 0.0
    %342 = vmatpush.msra.mxu0 0.0
    %343 = vmatpush.msra.mxu0 0.0
    %344 = vmatpush.msra.mxu0 0.0
    %345 = vmatpush.msra.mxu0 0.0
    %346 = vmatpush.msra.mxu0 0.0
    %347 = vmatpush.msra.mxu0 0.0
    %348 = vmatpush.msra.mxu0 0.0
    %349 = vmatpush.msra.mxu0 %v336
    %350 = vmatpush.msra.mxu0 %v335
    %351 = vmatpush.msra.mxu0 %v334
    %352 = vmatpush.msra.mxu0 %v333
    %353 = vmatmul.f32.gmra.mxu0 %v305
    %v354 = vpop.f32.mrf.mxu0
    %v355 = vadd.f32 0.0, %v354
    %356 = vdwg.mxu0
    %v357 = vadd.f32 %v331, %v355
    %v358 = vxor.u32 %v327, 2147483648
    %v359 = vmul.f32 %v358, 1.442695
    %v360 = vpow.pop %v359
    %v361 = vadd.f32 %v360, 1.0
    %v362 = vrcp.pop %v361
    %v363 = vmul.f32 %v361, %v362
    %v364 = vsub.f32 1.0, %v363
    %v365 = vmul.f32 %v362, %v364
    %v366 = vadd.f32 %v362, %v365
    %vm367 = vweird.f32 %v361
    %vm368 = vweird.f32 %v362
    %vm369 = vmor %vm367, %vm368
    %v370 = vsel %vm369, %v362, %v366
    %v371 = vand.u32 2147483647, %v361
    %vm372 = vcmp.eq.f32.partialorder %v371, 8.507059e+37
    %v373 = vand.u32 %v361, 2147483648
    %v374 = vor.u32 1.1754944e-38, %v373
    %v375 = vsel %vm372, %v374, %v370
    %v376 = vmul.f32 1.0, %v375
    %v377 = vtanh.pop %v327
    %v378 = vmul.f32 %v376, 0.0
    %380 = vrot.lane.b32.xlu0 %v377, 64
    %v381 = vpop.permute.xlu0 %380
    %v383 = vmul.f32 %v376, %v381
    %385 = vrot.lane.b32.xlu0 %v383, 32
    %v386 = vpop.permute.xlu0 %385
    %v388 = vadd.f32 %v378, %v386
    %v389 = vtanh.pop %v388
    %391 = vrot.lane.b32.xlu0 %v389, 64
    %v392 = vpop.permute.xlu0 %391
    %v394 = vmul.f32 %v376, %v392
    %v395 = vxor.u32 %v357, 2147483648
    %v396 = vmul.f32 %v395, 1.442695
    %v397 = vpow.pop %v396
    %v398 = vadd.f32 %v397, 1.0
    %v399 = vrcp.pop %v398
    %v400 = vmul.f32 %v398, %v399
    %v401 = vsub.f32 1.0, %v400
    %v402 = vmul.f32 %v399, %v401
    %v403 = vadd.f32 %v399, %v402
    %vm404 = vweird.f32 %v398
    %vm405 = vweird.f32 %v399
    %vm406 = vmor %vm404, %vm405
    %v407 = vsel %vm406, %v399, %v403
    %v408 = vand.u32 2147483647, %v398
    %vm409 = vcmp.eq.f32.partialorder %v408, 8.507059e+37
    %v410 = vand.u32 %v398, 2147483648
    %v411 = vor.u32 1.1754944e-38, %v410
    %v412 = vsel %vm409, %v411, %v407
    %v413 = vmul.f32 1.0, %v412
    %v414 = vtanh.pop %v357
    %v415 = vmul.f32 %v413, 0.0
    %417 = vrot.lane.b32.xlu0 %v414, 64
    %v418 = vpop.permute.xlu0 %417
    %v420 = vmul.f32 %v413, %v418
    %422 = vrot.lane.b32.xlu0 %v420, 32
    %v423 = vpop.permute.xlu0 %422
    %v425 = vadd.f32 %v415, %v423
    %v426 = vtanh.pop %v425
    %428 = vrot.lane.b32.xlu0 %v426, 64
    %v429 = vpop.permute.xlu0 %428
    %v431 = vmul.f32 %v413, %v429
    %s432 = smul.u32 1, 2
    %s433 = smul.addr %s432, 8
    %s434 = scalar_lea.vmem [#allocation2], %s433
    %v435 = vld [vmem:[%s434] sm:$0xff]
    %437 = vrot.lane.b32.xlu0 %v394, 32
    %v438 = vpop.permute.xlu0 %437
    %v439 = vsel %vm303, %v438, 0
    %441 = vmatpush.msra.mxu0 0.0
    %442 = vmatpush.msra.mxu0 0.0
    %443 = vmatpush.msra.mxu0 0.0
    %444 = vmatpush.msra.mxu0 0.0
    %445 = vmatpush.msra.mxu0 0.0
    %446 = vmatpush.msra.mxu0 0.0
    %447 = vmatpush.msra.mxu0 0.0
    %448 = vmatpush.msra.mxu0 0.0
    %449 = vmatpush.msra.mxu0 0.0
    %450 = vmatpush.msra.mxu0 0.0
    %451 = vmatpush.msra.mxu0 0.0
    %452 = vmatpush.msra.mxu0 0.0
    %453 = vmatpush.msra.mxu0 %v302
    %454 = vmatpush.msra.mxu0 %v301
    %455 = vmatpush.msra.mxu0 %v300
    %456 = vmatpush.msra.mxu0 %v299
    %457 = vmatmul.f32.gmra.mxu0 %v439
    %v458 = vpop.f32.mrf.mxu0
    %v459 = vadd.f32 0.0, %v458
    %460 = vdwg.mxu0
    %v461 = vadd.f32 %v435, %v459
    %s462 = smul.u32 6, 2
    %s463 = smul.addr %s462, 8
    %s464 = scalar_lea.vmem [#allocation2], %s463
    %v465 = vld [vmem:[%s464 + $0x8] sm:$0xff]
    %467 = vrot.lane.b32.xlu0 %v431, 32
    %v468 = vpop.permute.xlu0 %467
    %v469 = vsel %vm303, %v468, 0
    %471 = vmatpush.msra.mxu0 0.0
    %472 = vmatpush.msra.mxu0 0.0
    %473 = vmatpush.msra.mxu0 0.0
    %474 = vmatpush.msra.mxu0 0.0
    %475 = vmatpush.msra.mxu0 0.0
    %476 = vmatpush.msra.mxu0 0.0
    %477 = vmatpush.msra.mxu0 0.0
    %478 = vmatpush.msra.mxu0 0.0
    %479 = vmatpush.msra.mxu0 0.0
    %480 = vmatpush.msra.mxu0 0.0
    %481 = vmatpush.msra.mxu0 0.0
    %482 = vmatpush.msra.mxu0 0.0
    %483 = vmatpush.msra.mxu0 %v336
    %484 = vmatpush.msra.mxu0 %v335
    %485 = vmatpush.msra.mxu0 %v334
    %486 = vmatpush.msra.mxu0 %v333
    %487 = vmatmul.f32.gmra.mxu0 %v469
    %v488 = vpop.f32.mrf.mxu0
    %v489 = vadd.f32 0.0, %v488
    %490 = vdwg.mxu0
    %v491 = vadd.f32 %v465, %v489
    %v492 = vxor.u32 %v461, 2147483648
    %v493 = vmul.f32 %v492, 1.442695
    %v494 = vpow.pop %v493
    %v495 = vadd.f32 %v494, 1.0
    %v496 = vrcp.pop %v495
    %v497 = vmul.f32 %v495, %v496
    %v498 = vsub.f32 1.0, %v497
    %v499 = vmul.f32 %v496, %v498
    %v500 = vadd.f32 %v496, %v499
    %vm501 = vweird.f32 %v495
    %vm502 = vweird.f32 %v496
    %vm503 = vmor %vm501, %vm502
    %v504 = vsel %vm503, %v496, %v500
    %v505 = vand.u32 2147483647, %v495
    %vm506 = vcmp.eq.f32.partialorder %v505, 8.507059e+37
    %v507 = vand.u32 %v495, 2147483648
    %v508 = vor.u32 1.1754944e-38, %v507
    %v509 = vsel %vm506, %v508, %v504
    %v510 = vmul.f32 1.0, %v509
    %v511 = vtanh.pop %v461
    %v512 = vmul.f32 %v510, %v388
    %514 = vrot.lane.b32.xlu0 %v511, 64
    %v515 = vpop.permute.xlu0 %514
    %v517 = vmul.f32 %v510, %v515
    %519 = vrot.lane.b32.xlu0 %v517, 32
    %v520 = vpop.permute.xlu0 %519
    %v522 = vadd.f32 %v512, %v520
    %v523 = vtanh.pop %v522
    %525 = vrot.lane.b32.xlu0 %v523, 64
    %v526 = vpop.permute.xlu0 %525
    %v528 = vmul.f32 %v510, %v526
    %v529 = vxor.u32 %v491, 2147483648
    %v530 = vmul.f32 %v529, 1.442695
    %v531 = vpow.pop %v530
    %v532 = vadd.f32 %v531, 1.0
    %v533 = vrcp.pop %v532
    %v534 = vmul.f32 %v532, %v533
    %v535 = vsub.f32 1.0, %v534
    %v536 = vmul.f32 %v533, %v535
    %v537 = vadd.f32 %v533, %v536
    %vm538 = vweird.f32 %v532
    %vm539 = vweird.f32 %v533
    %vm540 = vmor %vm538, %vm539
    %v541 = vsel %vm540, %v533, %v537
    %v542 = vand.u32 2147483647, %v532
    %vm543 = vcmp.eq.f32.partialorder %v542, 8.507059e+37
    %v544 = vand.u32 %v532, 2147483648
    %v545 = vor.u32 1.1754944e-38, %v544
    %v546 = vsel %vm543, %v545, %v541
    %v547 = vmul.f32 1.0, %v546
    %v548 = vtanh.pop %v491
    %v549 = vmul.f32 %v547, %v425
    %551 = vrot.lane.b32.xlu0 %v548, 64
    %v552 = vpop.permute.xlu0 %551
    %v554 = vmul.f32 %v547, %v552
    %556 = vrot.lane.b32.xlu0 %v554, 32
    %v557 = vpop.permute.xlu0 %556
    %v559 = vadd.f32 %v549, %v557
    %v560 = vtanh.pop %v559
    %562 = vrot.lane.b32.xlu0 %v560, 64
    %v563 = vpop.permute.xlu0 %562
    %v565 = vmul.f32 %v547, %v563
    %s566 = smul.u32 2, 2
    %s567 = smul.addr %s566, 8
    %s568 = scalar_lea.vmem [#allocation2], %s567
    %v569 = vld [vmem:[%s568] sm:$0xff]
    %571 = vrot.lane.b32.xlu0 %v528, 32
    %v572 = vpop.permute.xlu0 %571
    %v573 = vsel %vm303, %v572, 0
    %575 = vmatpush.msra.mxu0 0.0
    %576 = vmatpush.msra.mxu0 0.0
    %577 = vmatpush.msra.mxu0 0.0
    %578 = vmatpush.msra.mxu0 0.0
    %579 = vmatpush.msra.mxu0 0.0
    %580 = vmatpush.msra.mxu0 0.0
    %581 = vmatpush.msra.mxu0 0.0
    %582 = vmatpush.msra.mxu0 0.0
    %583 = vmatpush.msra.mxu0 0.0
    %584 = vmatpush.msra.mxu0 0.0
    %585 = vmatpush.msra.mxu0 0.0
    %586 = vmatpush.msra.mxu0 0.0
    %587 = vmatpush.msra.mxu0 %v302
    %588 = vmatpush.msra.mxu0 %v301
    %589 = vmatpush.msra.mxu0 %v300
    %590 = vmatpush.msra.mxu0 %v299
    %591 = vmatmul.f32.gmra.mxu0 %v573
    %v592 = vpop.f32.mrf.mxu0
    %v593 = vadd.f32 0.0, %v592
    %594 = vdwg.mxu0
    %v595 = vadd.f32 %v569, %v593
    %s596 = smul.u32 5, 2
    %s597 = smul.addr %s596, 8
    %s598 = scalar_lea.vmem [#allocation2], %s597
    %v599 = vld [vmem:[%s598 + $0x8] sm:$0xff]
    %601 = vrot.lane.b32.xlu0 %v565, 32
    %v602 = vpop.permute.xlu0 %601
    %v603 = vsel %vm303, %v602, 0
    %605 = vmatpush.msra.mxu0 0.0
    %606 = vmatpush.msra.mxu0 0.0
    %607 = vmatpush.msra.mxu0 0.0
    %608 = vmatpush.msra.mxu0 0.0
    %609 = vmatpush.msra.mxu0 0.0
    %610 = vmatpush.msra.mxu0 0.0
    %611 = vmatpush.msra.mxu0 0.0
    %612 = vmatpush.msra.mxu0 0.0
    %613 = vmatpush.msra.mxu0 0.0
    %614 = vmatpush.msra.mxu0 0.0
    %615 = vmatpush.msra.mxu0 0.0
    %616 = vmatpush.msra.mxu0 0.0
    %617 = vmatpush.msra.mxu0 %v336
    %618 = vmatpush.msra.mxu0 %v335
    %619 = vmatpush.msra.mxu0 %v334
    %620 = vmatpush.msra.mxu0 %v333
    %621 = vmatmul.f32.gmra.mxu0 %v603
    %v622 = vpop.f32.mrf.mxu0
    %v623 = vadd.f32 0.0, %v622
    %624 = vdwg.mxu0
    %v625 = vadd.f32 %v599, %v623
    %v626 = vxor.u32 %v595, 2147483648
    %v627 = vmul.f32 %v626, 1.442695
    %v628 = vpow.pop %v627
    %v629 = vadd.f32 %v628, 1.0
    %v630 = vrcp.pop %v629
    %v631 = vmul.f32 %v629, %v630
    %v632 = vsub.f32 1.0, %v631
    %v633 = vmul.f32 %v630, %v632
    %v634 = vadd.f32 %v630, %v633
    %vm635 = vweird.f32 %v629
    %vm636 = vweird.f32 %v630
    %vm637 = vmor %vm635, %vm636
    %v638 = vsel %vm637, %v630, %v634
    %v639 = vand.u32 2147483647, %v629
    %vm640 = vcmp.eq.f32.partialorder %v639, 8.507059e+37
    %v641 = vand.u32 %v629, 2147483648
    %v642 = vor.u32 1.1754944e-38, %v641
    %v643 = vsel %vm640, %v642, %v638
    %v644 = vmul.f32 1.0, %v643
    %v645 = vtanh.pop %v595
    %v646 = vmul.f32 %v644, %v522
    %648 = vrot.lane.b32.xlu0 %v645, 64
    %v649 = vpop.permute.xlu0 %648
    %v651 = vmul.f32 %v644, %v649
    %653 = vrot.lane.b32.xlu0 %v651, 32
    %v654 = vpop.permute.xlu0 %653
    %v656 = vadd.f32 %v646, %v654
    %v657 = vtanh.pop %v656
    %659 = vrot.lane.b32.xlu0 %v657, 64
    %v660 = vpop.permute.xlu0 %659
    %v662 = vmul.f32 %v644, %v660
    %v663 = vxor.u32 %v625, 2147483648
    %v664 = vmul.f32 %v663, 1.442695
    %v665 = vpow.pop %v664
    %v666 = vadd.f32 %v665, 1.0
    %v667 = vrcp.pop %v666
    %v668 = vmul.f32 %v666, %v667
    %v669 = vsub.f32 1.0, %v668
    %v670 = vmul.f32 %v667, %v669
    %v671 = vadd.f32 %v667, %v670
    %vm672 = vweird.f32 %v666
    %vm673 = vweird.f32 %v667
    %vm674 = vmor %vm672, %vm673
    %v675 = vsel %vm674, %v667, %v671
    %v676 = vand.u32 2147483647, %v666
    %vm677 = vcmp.eq.f32.partialorder %v676, 8.507059e+37
    %v678 = vand.u32 %v666, 2147483648
    %v679 = vor.u32 1.1754944e-38, %v678
    %v680 = vsel %vm677, %v679, %v675
    %v681 = vmul.f32 1.0, %v680
    %v682 = vtanh.pop %v625
    %v683 = vmul.f32 %v681, %v559
    %685 = vrot.lane.b32.xlu0 %v682, 64
    %v686 = vpop.permute.xlu0 %685
    %v688 = vmul.f32 %v681, %v686
    %690 = vrot.lane.b32.xlu0 %v688, 32
    %v691 = vpop.permute.xlu0 %690
    %v693 = vadd.f32 %v683, %v691
    %v694 = vtanh.pop %v693
    %696 = vrot.lane.b32.xlu0 %v694, 64
    %v697 = vpop.permute.xlu0 %696
    %v699 = vmul.f32 %v681, %v697
    %s700 = smul.u32 3, 2
    %s701 = smul.addr %s700, 8
    %s702 = scalar_lea.vmem [#allocation2], %s701
    %v703 = vld [vmem:[%s702] sm:$0xff]
    %705 = vrot.lane.b32.xlu0 %v662, 32
    %v706 = vpop.permute.xlu0 %705
    %v707 = vsel %vm303, %v706, 0
    %709 = vmatpush.msra.mxu0 0.0
    %710 = vmatpush.msra.mxu0 0.0
    %711 = vmatpush.msra.mxu0 0.0
    %712 = vmatpush.msra.mxu0 0.0
    %713 = vmatpush.msra.mxu0 0.0
    %714 = vmatpush.msra.mxu0 0.0
    %715 = vmatpush.msra.mxu0 0.0
    %716 = vmatpush.msra.mxu0 0.0
    %717 = vmatpush.msra.mxu0 0.0
    %718 = vmatpush.msra.mxu0 0.0
    %719 = vmatpush.msra.mxu0 0.0
    %720 = vmatpush.msra.mxu0 0.0
    %721 = vmatpush.msra.mxu0 %v302
    %722 = vmatpush.msra.mxu0 %v301
    %723 = vmatpush.msra.mxu0 %v300
    %724 = vmatpush.msra.mxu0 %v299
    %725 = vmatmul.f32.gmra.mxu0 %v707
    %v726 = vpop.f32.mrf.mxu0
    %v727 = vadd.f32 0.0, %v726
    %728 = vdwg.mxu0
    %v729 = vadd.f32 %v703, %v727
    %s730 = smul.u32 4, 2
    %s731 = smul.addr %s730, 8
    %s732 = scalar_lea.vmem [#allocation2], %s731
    %v733 = vld [vmem:[%s732 + $0x8] sm:$0xff]
    %735 = vrot.lane.b32.xlu0 %v699, 32
    %v736 = vpop.permute.xlu0 %735
    %v737 = vsel %vm303, %v736, 0
    %739 = vmatpush.msra.mxu0 0.0
    %740 = vmatpush.msra.mxu0 0.0
    %741 = vmatpush.msra.mxu0 0.0
    %742 = vmatpush.msra.mxu0 0.0
    %743 = vmatpush.msra.mxu0 0.0
    %744 = vmatpush.msra.mxu0 0.0
    %745 = vmatpush.msra.mxu0 0.0
    %746 = vmatpush.msra.mxu0 0.0
    %747 = vmatpush.msra.mxu0 0.0
    %748 = vmatpush.msra.mxu0 0.0
    %749 = vmatpush.msra.mxu0 0.0
    %750 = vmatpush.msra.mxu0 0.0
    %751 = vmatpush.msra.mxu0 %v336
    %752 = vmatpush.msra.mxu0 %v335
    %753 = vmatpush.msra.mxu0 %v334
    %754 = vmatpush.msra.mxu0 %v333
    %755 = vmatmul.f32.gmra.mxu0 %v737
    %v756 = vpop.f32.mrf.mxu0
    %v757 = vadd.f32 0.0, %v756
    %758 = vdwg.mxu0
    %v759 = vadd.f32 %v733, %v757
    %v760 = vxor.u32 %v729, 2147483648
    %v761 = vmul.f32 %v760, 1.442695
    %v762 = vpow.pop %v761
    %v763 = vadd.f32 %v762, 1.0
    %v764 = vrcp.pop %v763
    %v765 = vmul.f32 %v763, %v764
    %v766 = vsub.f32 1.0, %v765
    %v767 = vmul.f32 %v764, %v766
    %v768 = vadd.f32 %v764, %v767
    %vm769 = vweird.f32 %v763
    %vm770 = vweird.f32 %v764
    %vm771 = vmor %vm769, %vm770
    %v772 = vsel %vm771, %v764, %v768
    %v773 = vand.u32 2147483647, %v763
    %vm774 = vcmp.eq.f32.partialorder %v773, 8.507059e+37
    %v775 = vand.u32 %v763, 2147483648
    %v776 = vor.u32 1.1754944e-38, %v775
    %v777 = vsel %vm774, %v776, %v772
    %v778 = vmul.f32 1.0, %v777
    %v779 = vtanh.pop %v729
    %v780 = vmul.f32 %v778, %v656
    %782 = vrot.lane.b32.xlu0 %v779, 64
    %v783 = vpop.permute.xlu0 %782
    %v785 = vmul.f32 %v778, %v783
    %787 = vrot.lane.b32.xlu0 %v785, 32
    %v788 = vpop.permute.xlu0 %787
    %v790 = vadd.f32 %v780, %v788
    %v791 = vtanh.pop %v790
    %793 = vrot.lane.b32.xlu0 %v791, 64
    %v794 = vpop.permute.xlu0 %793
    %v796 = vmul.f32 %v778, %v794
    %v797 = vxor.u32 %v759, 2147483648
    %v798 = vmul.f32 %v797, 1.442695
    %v799 = vpow.pop %v798
    %v800 = vadd.f32 %v799, 1.0
    %v801 = vrcp.pop %v800
    %v802 = vmul.f32 %v800, %v801
    %v803 = vsub.f32 1.0, %v802
    %v804 = vmul.f32 %v801, %v803
    %v805 = vadd.f32 %v801, %v804
    %vm806 = vweird.f32 %v800
    %vm807 = vweird.f32 %v801
    %vm808 = vmor %vm806, %vm807
    %v809 = vsel %vm808, %v801, %v805
    %v810 = vand.u32 2147483647, %v800
    %vm811 = vcmp.eq.f32.partialorder %v810, 8.507059e+37
    %v812 = vand.u32 %v800, 2147483648
    %v813 = vor.u32 1.1754944e-38, %v812
    %v814 = vsel %vm811, %v813, %v809
    %v815 = vmul.f32 1.0, %v814
    %v816 = vtanh.pop %v759
    %v817 = vmul.f32 %v815, %v693
    %819 = vrot.lane.b32.xlu0 %v816, 64
    %v820 = vpop.permute.xlu0 %819
    %v822 = vmul.f32 %v815, %v820
    %824 = vrot.lane.b32.xlu0 %v822, 32
    %v825 = vpop.permute.xlu0 %824
    %v827 = vadd.f32 %v817, %v825
    %v828 = vtanh.pop %v827
    %830 = vrot.lane.b32.xlu0 %v828, 64
    %v831 = vpop.permute.xlu0 %830
    %v833 = vmul.f32 %v815, %v831
    %v834 = vld [vmem:[%s732] sm:$0xff]
    %836 = vrot.lane.b32.xlu0 %v796, 32
    %v837 = vpop.permute.xlu0 %836
    %v838 = vsel %vm303, %v837, 0
    %840 = vmatpush.msra.mxu0 0.0
    %841 = vmatpush.msra.mxu0 0.0
    %842 = vmatpush.msra.mxu0 0.0
    %843 = vmatpush.msra.mxu0 0.0
    %844 = vmatpush.msra.mxu0 0.0
    %845 = vmatpush.msra.mxu0 0.0
    %846 = vmatpush.msra.mxu0 0.0
    %847 = vmatpush.msra.mxu0 0.0
    %848 = vmatpush.msra.mxu0 0.0
    %849 = vmatpush.msra.mxu0 0.0
    %850 = vmatpush.msra.mxu0 0.0
    %851 = vmatpush.msra.mxu0 0.0
    %852 = vmatpush.msra.mxu0 %v302
    %853 = vmatpush.msra.mxu0 %v301
    %854 = vmatpush.msra.mxu0 %v300
    %855 = vmatpush.msra.mxu0 %v299
    %856 = vmatmul.f32.gmra.mxu0 %v838
    %v857 = vpop.f32.mrf.mxu0
    %v858 = vadd.f32 0.0, %v857
    %859 = vdwg.mxu0
    %v860 = vadd.f32 %v834, %v858
    %v861 = vld [vmem:[%s702 + $0x8] sm:$0xff]
    %863 = vrot.lane.b32.xlu0 %v833, 32
    %v864 = vpop.permute.xlu0 %863
    %v865 = vsel %vm303, %v864, 0
    %867 = vmatpush.msra.mxu0 0.0
    %868 = vmatpush.msra.mxu0 0.0
    %869 = vmatpush.msra.mxu0 0.0
    %870 = vmatpush.msra.mxu0 0.0
    %871 = vmatpush.msra.mxu0 0.0
    %872 = vmatpush.msra.mxu0 0.0
    %873 = vmatpush.msra.mxu0 0.0
    %874 = vmatpush.msra.mxu0 0.0
    %875 = vmatpush.msra.mxu0 0.0
    %876 = vmatpush.msra.mxu0 0.0
    %877 = vmatpush.msra.mxu0 0.0
    %878 = vmatpush.msra.mxu0 0.0
    %879 = vmatpush.msra.mxu0 %v336
    %880 = vmatpush.msra.mxu0 %v335
    %881 = vmatpush.msra.mxu0 %v334
    %882 = vmatpush.msra.mxu0 %v333
    %883 = vmatmul.f32.gmra.mxu0 %v865
    %v884 = vpop.f32.mrf.mxu0
    %v885 = vadd.f32 0.0, %v884
    %886 = vdwg.mxu0
    %v887 = vadd.f32 %v861, %v885
    %v888 = vxor.u32 %v860, 2147483648
    %v889 = vmul.f32 %v888, 1.442695
    %v890 = vpow.pop %v889
    %v891 = vadd.f32 %v890, 1.0
    %v892 = vrcp.pop %v891
    %v893 = vmul.f32 %v891, %v892
    %v894 = vsub.f32 1.0, %v893
    %v895 = vmul.f32 %v892, %v894
    %v896 = vadd.f32 %v892, %v895
    %vm897 = vweird.f32 %v891
    %vm898 = vweird.f32 %v892
    %vm899 = vmor %vm897, %vm898
    %v900 = vsel %vm899, %v892, %v896
    %v901 = vand.u32 2147483647, %v891
    %vm902 = vcmp.eq.f32.partialorder %v901, 8.507059e+37
    %v903 = vand.u32 %v891, 2147483648
    %v904 = vor.u32 1.1754944e-38, %v903
    %v905 = vsel %vm902, %v904, %v900
    %v906 = vmul.f32 1.0, %v905
    %v907 = vtanh.pop %v860
    %v908 = vmul.f32 %v906, %v790
    %910 = vrot.lane.b32.xlu0 %v907, 64
    %v911 = vpop.permute.xlu0 %910
    %v913 = vmul.f32 %v906, %v911
    %915 = vrot.lane.b32.xlu0 %v913, 32
    %v916 = vpop.permute.xlu0 %915
    %v918 = vadd.f32 %v908, %v916
    %v919 = vtanh.pop %v918
    %921 = vrot.lane.b32.xlu0 %v919, 64
    %v922 = vpop.permute.xlu0 %921
    %v924 = vmul.f32 %v906, %v922
    %v925 = vxor.u32 %v887, 2147483648
    %v926 = vmul.f32 %v925, 1.442695
    %v927 = vpow.pop %v926
    %v928 = vadd.f32 %v927, 1.0
    %v929 = vrcp.pop %v928
    %v930 = vmul.f32 %v928, %v929
    %v931 = vsub.f32 1.0, %v930
    %v932 = vmul.f32 %v929, %v931
    %v933 = vadd.f32 %v929, %v932
    %vm934 = vweird.f32 %v928
    %vm935 = vweird.f32 %v929
    %vm936 = vmor %vm934, %vm935
    %v937 = vsel %vm936, %v929, %v933
    %v938 = vand.u32 2147483647, %v928
    %vm939 = vcmp.eq.f32.partialorder %v938, 8.507059e+37
    %v940 = vand.u32 %v928, 2147483648
    %v941 = vor.u32 1.1754944e-38, %v940
    %v942 = vsel %vm939, %v941, %v937
    %v943 = vmul.f32 1.0, %v942
    %v944 = vtanh.pop %v887
    %v945 = vmul.f32 %v943, %v827
    %947 = vrot.lane.b32.xlu0 %v944, 64
    %v948 = vpop.permute.xlu0 %947
    %v950 = vmul.f32 %v943, %v948
    %952 = vrot.lane.b32.xlu0 %v950, 32
    %v953 = vpop.permute.xlu0 %952
    %v955 = vadd.f32 %v945, %v953
    %v956 = vtanh.pop %v955
    %958 = vrot.lane.b32.xlu0 %v956, 64
    %v959 = vpop.permute.xlu0 %958
    %v961 = vmul.f32 %v943, %v959
    %v962 = vld [vmem:[%s598] sm:$0xff]
    %964 = vrot.lane.b32.xlu0 %v924, 32
    %v965 = vpop.permute.xlu0 %964
    %v966 = vsel %vm303, %v965, 0
    %968 = vmatpush.msra.mxu0 0.0
    %969 = vmatpush.msra.mxu0 0.0
    %970 = vmatpush.msra.mxu0 0.0
    %971 = vmatpush.msra.mxu0 0.0
    %972 = vmatpush.msra.mxu0 0.0
    %973 = vmatpush.msra.mxu0 0.0
    %974 = vmatpush.msra.mxu0 0.0
    %975 = vmatpush.msra.mxu0 0.0
    %976 = vmatpush.msra.mxu0 0.0
    %977 = vmatpush.msra.mxu0 0.0
    %978 = vmatpush.msra.mxu0 0.0
    %979 = vmatpush.msra.mxu0 0.0
    %980 = vmatpush.msra.mxu0 %v302
    %981 = vmatpush.msra.mxu0 %v301
    %982 = vmatpush.msra.mxu0 %v300
    %983 = vmatpush.msra.mxu0 %v299
    %984 = vmatmul.f32.gmra.mxu0 %v966
    %v985 = vpop.f32.mrf.mxu0
    %v986 = vadd.f32 0.0, %v985
    %987 = vdwg.mxu0
    %v988 = vadd.f32 %v962, %v986
    %v989 = vld [vmem:[%s568 + $0x8] sm:$0xff]
    %991 = vrot.lane.b32.xlu0 %v961, 32
    %v992 = vpop.permute.xlu0 %991
    %v993 = vsel %vm303, %v992, 0
    %995 = vmatpush.msra.mxu0 0.0
    %996 = vmatpush.msra.mxu0 0.0
    %997 = vmatpush.msra.mxu0 0.0
    %998 = vmatpush.msra.mxu0 0.0
    %999 = vmatpush.msra.mxu0 0.0
    %1000 = vmatpush.msra.mxu0 0.0
    %1001 = vmatpush.msra.mxu0 0.0
    %1002 = vmatpush.msra.mxu0 0.0
    %1003 = vmatpush.msra.mxu0 0.0
    %1004 = vmatpush.msra.mxu0 0.0
    %1005 = vmatpush.msra.mxu0 0.0
    %1006 = vmatpush.msra.mxu0 0.0
    %1007 = vmatpush.msra.mxu0 %v336
    %1008 = vmatpush.msra.mxu0 %v335
    %1009 = vmatpush.msra.mxu0 %v334
    %1010 = vmatpush.msra.mxu0 %v333
    %1011 = vmatmul.f32.gmra.mxu0 %v993
    %v1012 = vpop.f32.mrf.mxu0
    %v1013 = vadd.f32 0.0, %v1012
    %1014 = vdwg.mxu0
    %v1015 = vadd.f32 %v989, %v1013
    %v1016 = vxor.u32 %v988, 2147483648
    %v1017 = vmul.f32 %v1016, 1.442695
    %v1018 = vpow.pop %v1017
    %v1019 = vadd.f32 %v1018, 1.0
    %v1020 = vrcp.pop %v1019
    %v1021 = vmul.f32 %v1019, %v1020
    %v1022 = vsub.f32 1.0, %v1021
    %v1023 = vmul.f32 %v1020, %v1022
    %v1024 = vadd.f32 %v1020, %v1023
    %vm1025 = vweird.f32 %v1019
    %vm1026 = vweird.f32 %v1020
    %vm1027 = vmor %vm1025, %vm1026
    %v1028 = vsel %vm1027, %v1020, %v1024
    %v1029 = vand.u32 2147483647, %v1019
    %vm1030 = vcmp.eq.f32.partialorder %v1029, 8.507059e+37
    %v1031 = vand.u32 %v1019, 2147483648
    %v1032 = vor.u32 1.1754944e-38, %v1031
    %v1033 = vsel %vm1030, %v1032, %v1028
    %v1034 = vmul.f32 1.0, %v1033
    %v1035 = vtanh.pop %v988
    %v1036 = vmul.f32 %v1034, %v918
    %1038 = vrot.lane.b32.xlu0 %v1035, 64
    %v1039 = vpop.permute.xlu0 %1038
    %v1041 = vmul.f32 %v1034, %v1039
    %1043 = vrot.lane.b32.xlu0 %v1041, 32
    %v1044 = vpop.permute.xlu0 %1043
    %v1046 = vadd.f32 %v1036, %v1044
    %v1047 = vtanh.pop %v1046
    %1049 = vrot.lane.b32.xlu0 %v1047, 64
    %v1050 = vpop.permute.xlu0 %1049
    %v1052 = vmul.f32 %v1034, %v1050
    %v1053 = vxor.u32 %v1015, 2147483648
    %v1054 = vmul.f32 %v1053, 1.442695
    %v1055 = vpow.pop %v1054
    %v1056 = vadd.f32 %v1055, 1.0
    %v1057 = vrcp.pop %v1056
    %v1058 = vmul.f32 %v1056, %v1057
    %v1059 = vsub.f32 1.0, %v1058
    %v1060 = vmul.f32 %v1057, %v1059
    %v1061 = vadd.f32 %v1057, %v1060
    %vm1062 = vweird.f32 %v1056
    %vm1063 = vweird.f32 %v1057
    %vm1064 = vmor %vm1062, %vm1063
    %v1065 = vsel %vm1064, %v1057, %v1061
    %v1066 = vand.u32 2147483647, %v1056
    %vm1067 = vcmp.eq.f32.partialorder %v1066, 8.507059e+37
    %v1068 = vand.u32 %v1056, 2147483648
    %v1069 = vor.u32 1.1754944e-38, %v1068
    %v1070 = vsel %vm1067, %v1069, %v1065
    %v1071 = vmul.f32 1.0, %v1070
    %v1072 = vtanh.pop %v1015
    %v1073 = vmul.f32 %v1071, %v955
    %1075 = vrot.lane.b32.xlu0 %v1072, 64
    %v1076 = vpop.permute.xlu0 %1075
    %v1078 = vmul.f32 %v1071, %v1076
    %1080 = vrot.lane.b32.xlu0 %v1078, 32
    %v1081 = vpop.permute.xlu0 %1080
    %v1083 = vadd.f32 %v1073, %v1081
    %v1084 = vtanh.pop %v1083
    %1086 = vrot.lane.b32.xlu0 %v1084, 64
    %v1087 = vpop.permute.xlu0 %1086
    %v1089 = vmul.f32 %v1071, %v1087
    %v1090 = vld [vmem:[%s464] sm:$0xff]
    %1092 = vrot.lane.b32.xlu0 %v1052, 32
    %v1093 = vpop.permute.xlu0 %1092
    %v1094 = vsel %vm303, %v1093, 0
    %1096 = vmatpush.msra.mxu0 0.0
    %1097 = vmatpush.msra.mxu0 0.0
    %1098 = vmatpush.msra.mxu0 0.0
    %1099 = vmatpush.msra.mxu0 0.0
    %1100 = vmatpush.msra.mxu0 0.0
    %1101 = vmatpush.msra.mxu0 0.0
    %1102 = vmatpush.msra.mxu0 0.0
    %1103 = vmatpush.msra.mxu0 0.0
    %1104 = vmatpush.msra.mxu0 0.0
    %1105 = vmatpush.msra.mxu0 0.0
    %1106 = vmatpush.msra.mxu0 0.0
    %1107 = vmatpush.msra.mxu0 0.0
    %1108 = vmatpush.msra.mxu0 %v302
    %1109 = vmatpush.msra.mxu0 %v301
    %1110 = vmatpush.msra.mxu0 %v300
    %1111 = vmatpush.msra.mxu0 %v299
    %1112 = vmatmul.f32.gmra.mxu0 %v1094
    %v1113 = vpop.f32.mrf.mxu0
    %v1114 = vadd.f32 0.0, %v1113
    %1115 = vdwg.mxu0
    %v1116 = vadd.f32 %v1090, %v1114
    %v1117 = vld [vmem:[%s434 + $0x8] sm:$0xff]
    %1119 = vrot.lane.b32.xlu0 %v1089, 32
    %v1120 = vpop.permute.xlu0 %1119
    %v1121 = vsel %vm303, %v1120, 0
    %1123 = vmatpush.msra.mxu0 0.0
    %1124 = vmatpush.msra.mxu0 0.0
    %1125 = vmatpush.msra.mxu0 0.0
    %1126 = vmatpush.msra.mxu0 0.0
    %1127 = vmatpush.msra.mxu0 0.0
    %1128 = vmatpush.msra.mxu0 0.0
    %1129 = vmatpush.msra.mxu0 0.0
    %1130 = vmatpush.msra.mxu0 0.0
    %1131 = vmatpush.msra.mxu0 0.0
    %1132 = vmatpush.msra.mxu0 0.0
    %1133 = vmatpush.msra.mxu0 0.0
    %1134 = vmatpush.msra.mxu0 0.0
    %1135 = vmatpush.msra.mxu0 %v336
    %1136 = vmatpush.msra.mxu0 %v335
    %1137 = vmatpush.msra.mxu0 %v334
    %1138 = vmatpush.msra.mxu0 %v333
    %1139 = vmatmul.f32.gmra.mxu0 %v1121
    %v1140 = vpop.f32.mrf.mxu0
    %v1141 = vadd.f32 0.0, %v1140
    %1142 = vdwg.mxu0
    %v1143 = vadd.f32 %v1117, %v1141
    %v1144 = vxor.u32 %v1116, 2147483648
    %v1145 = vmul.f32 %v1144, 1.442695
    %v1146 = vpow.pop %v1145
    %v1147 = vadd.f32 %v1146, 1.0
    %v1148 = vrcp.pop %v1147
    %v1149 = vmul.f32 %v1147, %v1148
    %v1150 = vsub.f32 1.0, %v1149
    %v1151 = vmul.f32 %v1148, %v1150
    %v1152 = vadd.f32 %v1148, %v1151
    %vm1153 = vweird.f32 %v1147
    %vm1154 = vweird.f32 %v1148
    %vm1155 = vmor %vm1153, %vm1154
    %v1156 = vsel %vm1155, %v1148, %v1152
    %v1157 = vand.u32 2147483647, %v1147
    %vm1158 = vcmp.eq.f32.partialorder %v1157, 8.507059e+37
    %v1159 = vand.u32 %v1147, 2147483648
    %v1160 = vor.u32 1.1754944e-38, %v1159
    %v1161 = vsel %vm1158, %v1160, %v1156
    %v1162 = vmul.f32 1.0, %v1161
    %v1163 = vtanh.pop %v1116
    %v1164 = vmul.f32 %v1162, %v1046
    %1166 = vrot.lane.b32.xlu0 %v1163, 64
    %v1167 = vpop.permute.xlu0 %1166
    %v1169 = vmul.f32 %v1162, %v1167
    %1171 = vrot.lane.b32.xlu0 %v1169, 32
    %v1172 = vpop.permute.xlu0 %1171
    %v1174 = vadd.f32 %v1164, %v1172
    %v1175 = vtanh.pop %v1174
    %1177 = vrot.lane.b32.xlu0 %v1175, 64
    %v1178 = vpop.permute.xlu0 %1177
    %v1180 = vmul.f32 %v1162, %v1178
    %v1181 = vxor.u32 %v1143, 2147483648
    %v1182 = vmul.f32 %v1181, 1.442695
    %v1183 = vpow.pop %v1182
    %v1184 = vadd.f32 %v1183, 1.0
    %v1185 = vrcp.pop %v1184
    %v1186 = vmul.f32 %v1184, %v1185
    %v1187 = vsub.f32 1.0, %v1186
    %v1188 = vmul.f32 %v1185, %v1187
    %v1189 = vadd.f32 %v1185, %v1188
    %vm1190 = vweird.f32 %v1184
    %vm1191 = vweird.f32 %v1185
    %vm1192 = vmor %vm1190, %vm1191
    %v1193 = vsel %vm1192, %v1185, %v1189
    %v1194 = vand.u32 2147483647, %v1184
    %vm1195 = vcmp.eq.f32.partialorder %v1194, 8.507059e+37
    %v1196 = vand.u32 %v1184, 2147483648
    %v1197 = vor.u32 1.1754944e-38, %v1196
    %v1198 = vsel %vm1195, %v1197, %v1193
    %v1199 = vmul.f32 1.0, %v1198
    %v1200 = vtanh.pop %v1143
    %v1201 = vmul.f32 %v1199, %v1083
    %1203 = vrot.lane.b32.xlu0 %v1200, 64
    %v1204 = vpop.permute.xlu0 %1203
    %v1206 = vmul.f32 %v1199, %v1204
    %1208 = vrot.lane.b32.xlu0 %v1206, 32
    %v1209 = vpop.permute.xlu0 %1208
    %v1211 = vadd.f32 %v1201, %v1209
    %v1212 = vtanh.pop %v1211
    %1214 = vrot.lane.b32.xlu0 %v1212, 64
    %v1215 = vpop.permute.xlu0 %1214
    %v1217 = vmul.f32 %v1199, %v1215
    %v1218 = vld [vmem:[%s330] sm:$0xff]
    %1220 = vrot.lane.b32.xlu0 %v1180, 32
    %v1221 = vpop.permute.xlu0 %1220
    %v1222 = vsel %vm303, %v1221, 0
    %1224 = vmatpush.msra.mxu0 0.0
    %1225 = vmatpush.msra.mxu0 0.0
    %1226 = vmatpush.msra.mxu0 0.0
    %1227 = vmatpush.msra.mxu0 0.0
    %1228 = vmatpush.msra.mxu0 0.0
    %1229 = vmatpush.msra.mxu0 0.0
    %1230 = vmatpush.msra.mxu0 0.0
    %1231 = vmatpush.msra.mxu0 0.0
    %1232 = vmatpush.msra.mxu0 0.0
    %1233 = vmatpush.msra.mxu0 0.0
    %1234 = vmatpush.msra.mxu0 0.0
    %1235 = vmatpush.msra.mxu0 0.0
    %1236 = vmatpush.msra.mxu0 %v302
    %1237 = vmatpush.msra.mxu0 %v301
    %1238 = vmatpush.msra.mxu0 %v300
    %1239 = vmatpush.msra.mxu0 %v299
    %1240 = vmatmul.f32.gmra.mxu0 %v1222
    %v1241 = vpop.f32.mrf.mxu0
    %v1242 = vadd.f32 0.0, %v1241
    %1243 = vdwg.mxu0
    %v1244 = vadd.f32 %v1218, %v1242
    %v1245 = vld [vmem:[%s297 + $0x8] sm:$0xff]
    %1247 = vrot.lane.b32.xlu0 %v1217, 32
    %v1248 = vpop.permute.xlu0 %1247
    %v1249 = vsel %vm303, %v1248, 0
    %1251 = vmatpush.msra.mxu0 0.0
    %1252 = vmatpush.msra.mxu0 0.0
    %1253 = vmatpush.msra.mxu0 0.0
    %1254 = vmatpush.msra.mxu0 0.0
    %1255 = vmatpush.msra.mxu0 0.0
    %1256 = vmatpush.msra.mxu0 0.0
    %1257 = vmatpush.msra.mxu0 0.0
    %1258 = vmatpush.msra.mxu0 0.0
    %1259 = vmatpush.msra.mxu0 0.0
    %1260 = vmatpush.msra.mxu0 0.0
    %1261 = vmatpush.msra.mxu0 0.0
    %1262 = vmatpush.msra.mxu0 0.0
    %1263 = vmatpush.msra.mxu0 %v336
    %1264 = vmatpush.msra.mxu0 %v335
    %1265 = vmatpush.msra.mxu0 %v334
    %1266 = vmatpush.msra.mxu0 %v333
    %1267 = vmatmul.f32.gmra.mxu0 %v1249
    %v1268 = vpop.f32.mrf.mxu0
    %v1269 = vadd.f32 0.0, %v1268
    %1270 = vdwg.mxu0
    %v1271 = vadd.f32 %v1245, %v1269
    %v1272 = vxor.u32 %v1244, 2147483648
    %v1273 = vmul.f32 %v1272, 1.442695
    %v1274 = vpow.pop %v1273
    %v1275 = vadd.f32 %v1274, 1.0
    %v1276 = vrcp.pop %v1275
    %v1277 = vmul.f32 %v1275, %v1276
    %v1278 = vsub.f32 1.0, %v1277
    %v1279 = vmul.f32 %v1276, %v1278
    %v1280 = vadd.f32 %v1276, %v1279
    %vm1281 = vweird.f32 %v1275
    %vm1282 = vweird.f32 %v1276
    %vm1283 = vmor %vm1281, %vm1282
    %v1284 = vsel %vm1283, %v1276, %v1280
    %v1285 = vand.u32 2147483647, %v1275
    %vm1286 = vcmp.eq.f32.partialorder %v1285, 8.507059e+37
    %v1287 = vand.u32 %v1275, 2147483648
    %v1288 = vor.u32 1.1754944e-38, %v1287
    %v1289 = vsel %vm1286, %v1288, %v1284
    %v1290 = vmul.f32 1.0, %v1289
    %v1291 = vtanh.pop %v1244
    %v1292 = vmul.f32 %v1290, %v1174
    %1294 = vrot.lane.b32.xlu0 %v1291, 64
    %v1295 = vpop.permute.xlu0 %1294
    %v1297 = vmul.f32 %v1290, %v1295
    %1299 = vrot.lane.b32.xlu0 %v1297, 32
    %v1300 = vpop.permute.xlu0 %1299
    %v1302 = vadd.f32 %v1292, %v1300
    %v1303 = vtanh.pop %v1302
    %1305 = vrot.lane.b32.xlu0 %v1303, 64
    %v1306 = vpop.permute.xlu0 %1305
    %v1308 = vmul.f32 %v1290, %v1306
    %v1309 = vxor.u32 %v1271, 2147483648
    %v1310 = vmul.f32 %v1309, 1.442695
    %v1311 = vpow.pop %v1310
    %v1312 = vadd.f32 %v1311, 1.0
    %v1313 = vrcp.pop %v1312
    %v1314 = vmul.f32 %v1312, %v1313
    %v1315 = vsub.f32 1.0, %v1314
    %v1316 = vmul.f32 %v1313, %v1315
    %v1317 = vadd.f32 %v1313, %v1316
    %vm1318 = vweird.f32 %v1312
    %vm1319 = vweird.f32 %v1313
    %vm1320 = vmor %vm1318, %vm1319
    %v1321 = vsel %vm1320, %v1313, %v1317
    %v1322 = vand.u32 2147483647, %v1312
    %vm1323 = vcmp.eq.f32.partialorder %v1322, 8.507059e+37
    %v1324 = vand.u32 %v1312, 2147483648
    %v1325 = vor.u32 1.1754944e-38, %v1324
    %v1326 = vsel %vm1323, %v1325, %v1321
    %v1327 = vmul.f32 1.0, %v1326
    %v1328 = vtanh.pop %v1271
    %v1329 = vmul.f32 %v1327, %v1211
    %1331 = vrot.lane.b32.xlu0 %v1328, 64
    %v1332 = vpop.permute.xlu0 %1331
    %v1334 = vmul.f32 %v1327, %v1332
    %1336 = vrot.lane.b32.xlu0 %v1334, 32
    %v1337 = vpop.permute.xlu0 %1336
    %v1339 = vadd.f32 %v1329, %v1337
    %v1340 = vtanh.pop %v1339
    %1342 = vrot.lane.b32.xlu0 %v1340, 64
    %v1343 = vpop.permute.xlu0 %1342
    %v1345 = vmul.f32 %v1327, %v1343
    %v1346 = vld [vmem:[#allocation6] sm:$0xff]
    %v1347 = vld [vmem:[#allocation6 + $0x8] sm:$0xff]
    %v1348 = vld [vmem:[#allocation6 + $0x10] sm:$0xff]
    %v1349 = vld [vmem:[#allocation6 + $0x18] sm:$0xff]
    %v1350 = vld [vmem:[#allocation8] sm:$0xff]
    %v1351 = vld [vmem:[#allocation8 + $0x8] sm:$0xff]
    %v1352 = vld [vmem:[#allocation8 + $0x10] sm:$0xff]
    %v1353 = vld [vmem:[#allocation8 + $0x18] sm:$0xff]
    %1355 = vrot.lane.b32.xlu0 %v1345, 32
    %v1356 = vpop.permute.xlu0 %1355
    %v1357 = vsel %vm303, %v1356, 0
    %1359 = vmatpush.msra.mxu0 0.0
    %1360 = vmatpush.msra.mxu0 0.0
    %1361 = vmatpush.msra.mxu0 0.0
    %1362 = vmatpush.msra.mxu0 0.0
    %1363 = vmatpush.msra.mxu0 0.0
    %1364 = vmatpush.msra.mxu0 0.0
    %1365 = vmatpush.msra.mxu0 0.0
    %1366 = vmatpush.msra.mxu0 0.0
    %1367 = vmatpush.msra.mxu0 0.0
    %1368 = vmatpush.msra.mxu0 0.0
    %1369 = vmatpush.msra.mxu0 0.0
    %1370 = vmatpush.msra.mxu0 0.0
    %1371 = vmatpush.msra.mxu0 %v1353
    %1372 = vmatpush.msra.mxu0 %v1352
    %1373 = vmatpush.msra.mxu0 %v1351
    %1374 = vmatpush.msra.mxu0 %v1350
    %1375 = vmatmul.f32.gmra.mxu0 %v1357
    %v1376 = vpop.f32.mrf.mxu0
    %v1377 = vadd.f32 0.0, %v1376
    %1378 = vdwg.mxu0
    %1380 = vrot.lane.b32.xlu0 %v1308, 32
    %v1381 = vpop.permute.xlu0 %1380
    %v1382 = vsel %vm303, %v1381, 0
    %1384 = vmatpush.msra.mxu0 0.0
    %1385 = vmatpush.msra.mxu0 0.0
    %1386 = vmatpush.msra.mxu0 0.0
    %1387 = vmatpush.msra.mxu0 0.0
    %1388 = vmatpush.msra.mxu0 0.0
    %1389 = vmatpush.msra.mxu0 0.0
    %1390 = vmatpush.msra.mxu0 0.0
    %1391 = vmatpush.msra.mxu0 0.0
    %1392 = vmatpush.msra.mxu0 0.0
    %1393 = vmatpush.msra.mxu0 0.0
    %1394 = vmatpush.msra.mxu0 0.0
    %1395 = vmatpush.msra.mxu0 0.0
    %1396 = vmatpush.msra.mxu0 %v1349
    %1397 = vmatpush.msra.mxu0 %v1348
    %1398 = vmatpush.msra.mxu0 %v1347
    %1399 = vmatpush.msra.mxu0 %v1346
    %1400 = vmatmul.f32.gmra.mxu0 %v1382
    %v1401 = vpop.f32.mrf.mxu0
    %v1402 = vadd.f32 %v1377, %v1401
    %1403 = vdwg.mxu0
    %v1404 = vld [vmem:[%s6] sm:$0x1]
    %v1406 = vperm.slane %v1404, 0
    %v1408 = vadd.f32 %v1402, %v1406
    %v1409 = vld [vmem:[#allocation9] sm:$0xff]
    %v1410 = vld [vmem:[#allocation9 + $0x8] sm:$0xff]
    %v1411 = vld [vmem:[#allocation9 + $0x10] sm:$0xff]
    %v1412 = vld [vmem:[#allocation9 + $0x18] sm:$0xff]
    %v1413 = vld [vmem:[%s8] sm:$0x1]
    %v1415 = vperm.slane %v1413, 0
    %v1418 = vsel %vm303, %v1408, 0
    %1420 = vmatpush.msra.mxu0 0.0
    %1421 = vmatpush.msra.mxu0 0.0
    %1422 = vmatpush.msra.mxu0 0.0
    %1423 = vmatpush.msra.mxu0 0.0
    %1424 = vmatpush.msra.mxu0 0.0
    %1425 = vmatpush.msra.mxu0 0.0
    %1426 = vmatpush.msra.mxu0 0.0
    %1427 = vmatpush.msra.mxu0 0.0
    %1428 = vmatpush.msra.mxu0 0.0
    %1429 = vmatpush.msra.mxu0 0.0
    %1430 = vmatpush.msra.mxu0 0.0
    %1431 = vmatpush.msra.mxu0 0.0
    %1432 = vmatpush.msra.mxu0 %v1412
    %1433 = vmatpush.msra.mxu0 %v1411
    %1434 = vmatpush.msra.mxu0 %v1410
    %1435 = vmatpush.msra.mxu0 %v1409
    %1436 = vmatmul.f32.gmra.mxu0 %v1418
    %v1437 = vpop.f32.mrf.mxu0
    %v1438 = vadd.f32 %v1415, %v1437
    %1439 = vdwg.mxu0
    %v1440 = vld [vmem:[#allocation11] sm:$0xff]
    %v1441 = vld [vmem:[#allocation11 + $0x8] sm:$0xff]
    %v1442 = vld [vmem:[#allocation11 + $0x10] sm:$0xff]
    %v1443 = vld [vmem:[#allocation11 + $0x18] sm:$0xff]
    %v1444 = vld [vmem:[#allocation12] sm:$0xff]
    %v1445 = vld [vmem:[#allocation12 + $0x8] sm:$0xff]
    %v1446 = vld [vmem:[#allocation12 + $0x10] sm:$0xff]
    %v1447 = vld [vmem:[#allocation12 + $0x18] sm:$0xff]
    %1448 = vmatpush.msra.mxu0 0.0
    %1449 = vmatpush.msra.mxu0 0.0
    %1450 = vmatpush.msra.mxu0 0.0
    %1451 = vmatpush.msra.mxu0 0.0
    %1452 = vmatpush.msra.mxu0 0.0
    %1453 = vmatpush.msra.mxu0 0.0
    %1454 = vmatpush.msra.mxu0 0.0
    %1455 = vmatpush.msra.mxu0 0.0
    %1456 = vmatpush.msra.mxu0 0.0
    %1457 = vmatpush.msra.mxu0 0.0
    %1458 = vmatpush.msra.mxu0 0.0
    %1459 = vmatpush.msra.mxu0 0.0
    %1460 = vmatpush.msra.mxu0 %v1447
    %1461 = vmatpush.msra.mxu0 %v1446
    %1462 = vmatpush.msra.mxu0 %v1445
    %1463 = vmatpush.msra.mxu0 %v1444
    %1464 = vmatmul.f32.gmra.mxu0 %v1382
    %v1465 = vpop.f32.mrf.mxu0
    %v1466 = vadd.f32 0.0, %v1465
    %1467 = vdwg.mxu0
    %v1469 = vsel %vm303, %v1438, 0
    %1471 = vmatpush.msra.mxu0 0.0
    %1472 = vmatpush.msra.mxu0 0.0
    %1473 = vmatpush.msra.mxu0 0.0
    %1474 = vmatpush.msra.mxu0 0.0
    %1475 = vmatpush.msra.mxu0 0.0
    %1476 = vmatpush.msra.mxu0 0.0
    %1477 = vmatpush.msra.mxu0 0.0
    %1478 = vmatpush.msra.mxu0 0.0
    %1479 = vmatpush.msra.mxu0 0.0
    %1480 = vmatpush.msra.mxu0 0.0
    %1481 = vmatpush.msra.mxu0 0.0
    %1482 = vmatpush.msra.mxu0 0.0
    %1483 = vmatpush.msra.mxu0 %v1443
    %1484 = vmatpush.msra.mxu0 %v1442
    %1485 = vmatpush.msra.mxu0 %v1441
    %1486 = vmatpush.msra.mxu0 %v1440
    %1487 = vmatmul.f32.gmra.mxu0 %v1469
    %v1488 = vpop.f32.mrf.mxu0
    %v1489 = vadd.f32 %v1466, %v1488
    %1490 = vdwg.mxu0
    %v1491 = vld [vmem:[#allocation14] sm:$0xff]
    %v1492 = vld [vmem:[#allocation14 + $0x8] sm:$0xff]
    %v1493 = vld [vmem:[#allocation14 + $0x10] sm:$0xff]
    %v1494 = vld [vmem:[#allocation14 + $0x18] sm:$0xff]
    %1495 = vmatpush.msra.mxu0 0.0
    %1496 = vmatpush.msra.mxu0 0.0
    %1497 = vmatpush.msra.mxu0 0.0
    %1498 = vmatpush.msra.mxu0 0.0
    %1499 = vmatpush.msra.mxu0 0.0
    %1500 = vmatpush.msra.mxu0 0.0
    %1501 = vmatpush.msra.mxu0 0.0
    %1502 = vmatpush.msra.mxu0 0.0
    %1503 = vmatpush.msra.mxu0 0.0
    %1504 = vmatpush.msra.mxu0 0.0
    %1505 = vmatpush.msra.mxu0 0.0
    %1506 = vmatpush.msra.mxu0 0.0
    %1507 = vmatpush.msra.mxu0 %v1494
    %1508 = vmatpush.msra.mxu0 %v1493
    %1509 = vmatpush.msra.mxu0 %v1492
    %1510 = vmatpush.msra.mxu0 %v1491
    %1511 = vmatmul.f32.gmra.mxu0 %v1357
    %v1512 = vpop.f32.mrf.mxu0
    %v1513 = vadd.f32 0.0, %v1512
    %1514 = vdwg.mxu0
    %v1515 = vadd.f32 %v1489, %v1513
    %v1516 = vld [vmem:[%s12] sm:$0x1]
    %v1518 = vperm.slane %v1516, 0
    %v1520 = vadd.f32 %v1515, %v1518
    %1521 = vst.msk [vmem:[#allocation15] sm:$0xff] %vm303, %v1520
    // Predicated region
    $region82: #{tpu_custom_call.1} parent=1 // pred_check
      _
    $region83: #{tpu_custom_call.1} parent=1 // pred_check_branch
      %1523 = sbr.rel (0) target = $region85
    $region84: #{tpu_custom_call.1} parent=1 // pred_region
      %1525 = vsyncadd [#allocation5], 0
      %s1527 = sshll.u32 [#allocation15], 4
      %s1528 = int_to_ptr.vmem [resolvable:$true] %s1527
      %s1529 = sshll.u32 %s13, 4
      %s1530 = int_to_ptr.hbm [resolvable:$true] %s1529
      %1532 = dma.vmem_to_hbm [thread:$0]  %s1528, 128, %s1530, [#allocation5]
    $region85: #{tpu_custom_call.1} parent=1 // pred_fallthru
      _
    // Predicated region
    $region86: #{tpu_custom_call.1} parent=1 // pred_check
      _
    $region87: #{tpu_custom_call.1} parent=1 // pred_check_branch
      %1534 = sbr.rel (0) target = $region89
    $region88: #{tpu_custom_call.1} parent=1 // pred_region
      %1536 = dma.done [#allocation5], 128
    $region89: #{tpu_custom_call.1} parent=1 // pred_fallthru
      _
    %1537 = vsyncpa [#allocation4], 1
    %1538 = vsyncpa [#allocation7], 1
    %1539 = vsyncpa [#allocation10], 1
    %1540 = vsyncpa [#allocation13], 1
    %1541 = vsyncpa [#allocation5], 1

</llo_original>
